<compile_context>
chip_gen: v7x
topology: tpu7x:2x2x1
jax: 0.10.0
libtpu: 0.0.40
codegen_flags: <defaults>
</compile_context>

<pallas_src>
import functools
import math

import jax
import jax.numpy as jnp
from jax.experimental import pallas as pl
from jax.experimental.pallas import tpu as pltpu


_NEG_INF = -1e30  # finite mask value: with kv tiles processed from 0 upward,
                  # every row has a real score by the first step, so masked
                  # entries underflow to exactly 0 after exp().


# ----------------------------- kernel helpers -------------------------------

def _layernorm(x, g, b, eps=1e-5):
    mu = jnp.mean(x, axis=-1, keepdims=True)
    var = jnp.mean((x - mu) ** 2, axis=-1, keepdims=True)
    return (x - mu) * jax.lax.rsqrt(var + eps) * g + b


def _gelu_tanh(x):
    # matches nn.GELU(approximate='tanh')
    c = math.sqrt(2.0 / math.pi)
    return 0.5 * x * (1.0 + jnp.tanh(c * (x + 0.044715 * x * x * x)))


def _split_heads(x2d, n_head, hd):
    # (rows, C) -> (n_head, rows, hd); built from lane slices + major-axis
    # stack (robust Mosaic lowering).
    return jnp.stack([x2d[:, h * hd:(h + 1) * hd] for h in range(n_head)],
                     axis=0)


# ------------------------------- the kernel ---------------------------------

def block_kernel(x_q_ref, x_kv_ref,
                 ln1_w_ref, ln1_b_ref,
                 wq_ref, bq_ref, wk_ref, bk_ref, wv_ref, bv_ref,
                 proj_w_ref, proj_b_ref,
                 ln2_w_ref, ln2_b_ref,
                 fc_w_ref, fc_b_ref,
                 fcproj_w_ref, fcproj_b_ref,
                 o_ref,
                 q_scr, m_scr, l_scr, acc_scr,
                 *, n_head, tq, tk):
    qi = pl.program_id(1)
    ki = pl.program_id(2)
    nk = pl.num_programs(2)

    C = x_q_ref.shape[-1]
    hd = C // n_head
    scale = 1.0 / math.sqrt(hd)

    # ---- first kv step for this (b, q-tile): init state, compute q once ----
    @pl.when(ki == 0)
    def _init():
        m_scr[...] = jnp.full_like(m_scr, _NEG_INF)
        l_scr[...] = jnp.zeros_like(l_scr)
        acc_scr[...] = jnp.zeros_like(acc_scr)

        hq = _layernorm(x_q_ref[0], ln1_w_ref[0], ln1_b_ref[0])
        q = jnp.dot(hq.astype(jnp.bfloat16), wq_ref[...],
                    preferred_element_type=jnp.float32) + bq_ref[0]
        q = q * scale                            # fold 1/sqrt(hd) into q once
        q_scr[...] = _split_heads(q, n_head, hd).astype(jnp.bfloat16)

    # ---- flash step over this kv tile (skip fully-masked tiles) ----
    @pl.when(ki * tk <= qi * tq + (tq - 1))
    def _flash_step():
        hk = _layernorm(x_kv_ref[0], ln1_w_ref[0],
                        ln1_b_ref[0]).astype(jnp.bfloat16)
        k2d = jnp.dot(hk, wk_ref[...],
                      preferred_element_type=jnp.float32) + bk_ref[0]
        v2d = jnp.dot(hk, wv_ref[...],
                      preferred_element_type=jnp.float32) + bv_ref[0]
        k = _split_heads(k2d, n_head, hd).astype(jnp.bfloat16)  # (H, tk, hd)
        v = _split_heads(v2d, n_head, hd).astype(jnp.bfloat16)  # (H, tk, hd)

        # scores for all heads at once (batched matmul, f32 accumulation)
        s = jnp.einsum('hqd,hkd->hqk', q_scr[...], k,
                       preferred_element_type=jnp.float32)      # (H, tq, tk)

        # causal mask, built once per (q-tile, kv-tile) pair
        rows = qi * tq + jax.lax.broadcasted_iota(jnp.int32, (tq, tk), 0)
        cols = ki * tk + jax.lax.broadcasted_iota(jnp.int32, (tq, tk), 1)
        s = jnp.where((rows >= cols)[None, :, :], s, _NEG_INF)

        m_prev = m_scr[...]
        m_new = jnp.maximum(m_prev, jnp.max(s, axis=-1, keepdims=True))
        alpha = jnp.exp(m_prev - m_new)
        p = jnp.exp(s - m_new)
        l_scr[...] = alpha * l_scr[...] + jnp.sum(p, axis=-1, keepdims=True)
        acc_scr[...] = alpha * acc_scr[...] + jnp.einsum(
            'hqk,hkd->hqd', p.astype(jnp.bfloat16), v,
            preferred_element_type=jnp.float32)
        m_scr[...] = m_new

    # ---- last kv step: finish attention, residual, LN2, MLP, residual ----
    @pl.when(ki == nk - 1)
    def _finalize():
        y = acc_scr[...] * pl.reciprocal(l_scr[...], approx=True)  # (H,tq,hd)
        y2d = jnp.concatenate([y[h] for h in range(n_head)], axis=-1)
        attn_out = jnp.dot(y2d.astype(jnp.bfloat16), proj_w_ref[...],
                           preferred_element_type=jnp.float32) + proj_b_ref[0]
        x1 = x_q_ref[0] + attn_out

        h2 = _layernorm(x1, ln2_w_ref[0], ln2_b_ref[0]).astype(jnp.bfloat16)
        ff = jnp.dot(h2, fc_w_ref[...],
                     preferred_element_type=jnp.float32) + fc_b_ref[0]
        ff = _gelu_tanh(ff).astype(jnp.bfloat16)       # GELU math stays f32
        mlp_out = jnp.dot(ff, fcproj_w_ref[...],
                          preferred_element_type=jnp.float32) + fcproj_b_ref[0]
        o_ref[0] = (x1 + mlp_out).astype(o_ref.dtype)


# ------------------------------- wrapper -------------------------------------

def gpt_block(x, params, n_head, *, tq=None, tk=None):
    B, T, C = x.shape
    assert C % n_head == 0
    hd = C // n_head
    if tq is None:
        tq = min(T, 128)   # 128 rows ~= one MXU pass (keeps v5e happy too)
    if tk is None:
        tk = min(T, 128)
    assert T % tq == 0 and T % tk == 0
    nq, nk = T // tq, T // tk

    f32, bf16 = jnp.float32, jnp.bfloat16
    # Split the fused qkv projection once in the wrapper (clean, lane-aligned
    # per-projection weights) and pre-cast matmul weights to bf16 (halves the
    # resident weight VMEM / HBM traffic; accumulation stays f32 in-kernel).
    wq, wk, wv = jnp.split(params['attn_w'], 3, axis=1)
    bq, bk, bv = jnp.split(params['attn_b'], 3, axis=1)

    weight_args = [
        params['ln1_w'].astype(f32), params['ln1_b'].astype(f32),
        wq.astype(bf16), bq.astype(f32),
        wk.astype(bf16), bk.astype(f32),
        wv.astype(bf16), bv.astype(f32),
        params['proj_w'].astype(bf16), params['proj_b'].astype(f32),
        params['ln2_w'].astype(f32), params['ln2_b'].astype(f32),
        params['fc_w'].astype(bf16), params['fc_b'].astype(f32),
        params['fcproj_w'].astype(bf16), params['fcproj_b'].astype(f32),
    ]

    in_specs = [
        pl.BlockSpec((1, tq, C), lambda b, qi, ki: (b, qi, 0)),  # x rows (q)
        pl.BlockSpec((1, tk, C), lambda b, qi, ki: (b, ki, 0)),  # x rows (kv)
    ]
    for w in weight_args:
        assert w.ndim == 2
        in_specs.append(pl.BlockSpec(w.shape, lambda b, qi, ki: (0, 0)))

    # Advisory cost estimate so XLA schedules around this call sensibly.
    flops = 24 * B * T * C * C + 4 * B * T * T * C
    transcendentals = B * n_head * T * T + 4 * B * T * C
    bytes_accessed = (2 * B * T * C * 4
                      + sum(int(w.size) * w.dtype.itemsize for w in weight_args))

    return pl.pallas_call(
        functools.partial(block_kernel, n_head=n_head, tq=tq, tk=tk),
        out_shape=jax.ShapeDtypeStruct((B, T, C), x.dtype),
        grid=(B, nq, nk),
        in_specs=in_specs,
        out_specs=pl.BlockSpec((1, tq, C), lambda b, qi, ki: (b, qi, 0)),
        scratch_shapes=[
            pltpu.VMEM((n_head, tq, hd), bf16),   # q tile (heads-major)
            pltpu.VMEM((n_head, tq, 1), f32),     # running max  m
            pltpu.VMEM((n_head, tq, 1), f32),     # running sum  l
            pltpu.VMEM((n_head, tq, hd), f32),    # output accumulator
        ],
        compiler_params=pltpu.CompilerParams(
            dimension_semantics=("parallel", "parallel", "arbitrary")),
        cost_estimate=pl.CostEstimate(flops=flops,
                                      transcendentals=transcendentals,
                                      bytes_accessed=bytes_accessed),
    )(x, x, *weight_args)


# --------------------------- pure-JAX reference ------------------------------

def gpt_block_ref(x, params, n_head):
    B, T, C = x.shape
    hd = C // n_head

    def ln(v, g, b):
        mu = jnp.mean(v, -1, keepdims=True)
        var = jnp.mean((v - mu) ** 2, -1, keepdims=True)
        return (v - mu) * jax.lax.rsqrt(var + 1e-5) * g[0] + b[0]

    h = ln(x, params['ln1_w'], params['ln1_b'])
    qkv = h @ params['attn_w'] + params['attn_b'][0]
    q, k, v = jnp.split(qkv, 3, axis=-1)
    q = q.reshape(B, T, n_head, hd).transpose(0, 2, 1, 3)
    k = k.reshape(B, T, n_head, hd).transpose(0, 2, 1, 3)
    v = v.reshape(B, T, n_head, hd).transpose(0, 2, 1, 3)
    s = jnp.einsum('bhqd,bhkd->bhqk', q, k) / math.sqrt(hd)
    mask = jnp.tril(jnp.ones((T, T), bool))
    s = jnp.where(mask, s, -jnp.inf)
    p = jax.nn.softmax(s, axis=-1)
    y = jnp.einsum('bhqk,bhkd->bhqd', p, v)
    y = y.transpose(0, 2, 1, 3).reshape(B, T, C)
    x1 = x + (y @ params['proj_w'] + params['proj_b'][0])

    h2 = ln(x1, params['ln2_w'], params['ln2_b'])
    ff = h2 @ params['fc_w'] + params['fc_b'][0]
    cc = math.sqrt(2.0 / math.pi)
    ff = 0.5 * ff * (1.0 + jnp.tanh(cc * (ff + 0.044715 * ff ** 3)))
    return x1 + (ff @ params['fcproj_w'] + params['fcproj_b'][0])


# --------------------------------- main ---------------------------------------

if __name__ == "__main__":
    # Small shapes consistent with the module: batch=2, seq=16, n_embed=32,
    # heads=4; tq=tk=8 exercises the multi-tile flash / causal-skip path.
    B, T, C, NH = 2, 16, 32, 4

    key = jax.random.PRNGKey(0)
    keys = jax.random.split(key, 9)

    def nrm(k, shape, std=0.02):
        return (std * jax.random.normal(k, shape)).astype(jnp.float32)

    params = {
        'ln1_w':    jnp.ones((1, C), jnp.float32),
        'ln1_b':    jnp.zeros((1, C), jnp.float32),
        'attn_w':   nrm(keys[0], (C, 3 * C)),
        'attn_b':   nrm(keys[1], (1, 3 * C)),
        'proj_w':   nrm(keys[2], (C, C)),
        'proj_b':   nrm(keys[3], (1, C)),
        'ln2_w':    jnp.ones((1, C), jnp.float32),
        'ln2_b':    jnp.zeros((1, C), jnp.float32),
        'fc_w':     nrm(keys[4], (C, 4 * C)),
        'fc_b':     nrm(keys[5], (1, 4 * C)),
        'fcproj_w': nrm(keys[6], (4 * C, C)),
        'fcproj_b': nrm(keys[7], (1, C)),
    }

    x = jax.random.normal(keys[8], (B, T, C), jnp.float32)

    out = gpt_block(x, params, NH, tq=8, tk=8)
    out = jax.block_until_ready(out)

    ref = gpt_block_ref(x, params, NH)
    assert out.shape == (B, T, C)
    # bf16 matmul operands + approx reciprocal -> compare with loose tolerance.
    assert jnp.allclose(out, ref, atol=1e-2, rtol=1e-2), "mismatch vs reference"

    # TODO(synk): GPT-level embedding gather (wte/wpe), tied lm_head matmul and
    # cross-entropy are left to XLA; this kernel covers the per-layer Block.
    print("KERNEL_OK")
</pallas_src>

<mosaic_0001>
module attributes {stable_mosaic.version = 11 : i64} {
  func.func @block_kernel(%arg0: i32, %arg1: i32, %arg2: i32, %arg3: memref<1x8x32xf32, #tpu.memory_space<vmem>>, %arg4: memref<1x8x32xf32, #tpu.memory_space<vmem>>, %arg5: memref<1x32xf32, #tpu.memory_space<vmem>>, %arg6: memref<1x32xf32, #tpu.memory_space<vmem>>, %arg7: memref<32x32xbf16, #tpu.memory_space<vmem>>, %arg8: memref<1x32xf32, #tpu.memory_space<vmem>>, %arg9: memref<32x32xbf16, #tpu.memory_space<vmem>>, %arg10: memref<1x32xf32, #tpu.memory_space<vmem>>, %arg11: memref<32x32xbf16, #tpu.memory_space<vmem>>, %arg12: memref<1x32xf32, #tpu.memory_space<vmem>>, %arg13: memref<32x32xbf16, #tpu.memory_space<vmem>>, %arg14: memref<1x32xf32, #tpu.memory_space<vmem>>, %arg15: memref<1x32xf32, #tpu.memory_space<vmem>>, %arg16: memref<1x32xf32, #tpu.memory_space<vmem>>, %arg17: memref<32x128xbf16, #tpu.memory_space<vmem>>, %arg18: memref<1x128xf32, #tpu.memory_space<vmem>>, %arg19: memref<128x32xbf16, #tpu.memory_space<vmem>>, %arg20: memref<1x32xf32, #tpu.memory_space<vmem>>, %arg21: memref<1x8x32xf32, #tpu.memory_space<vmem>>, %arg22: memref<4x8x8xbf16, #tpu.memory_space<vmem>>, %arg23: memref<4x8x1xf32, #tpu.memory_space<vmem>>, %arg24: memref<4x8x1xf32, #tpu.memory_space<vmem>>, %arg25: memref<4x8x8xf32, #tpu.memory_space<vmem>>) attributes {dimension_semantics = [#tpu.dimension_semantics<parallel>, #tpu.dimension_semantics<parallel>, #tpu.dimension_semantics<arbitrary>], iteration_bounds = array<i64: 2, 2, 2>, scalar_prefetch = 0 : i64, scratch_operands = 4 : i64, tpu.core_type = #tpu.core_type<tc>, window_params = [{transform_indices = @transform_0, window_bounds = array<i64: 1, 8, 32>}, {transform_indices = @transform_1, window_bounds = array<i64: 1, 8, 32>}, {pipeline_mode = #tpu.pipeline_mode<synchronous>, transform_indices = @transform_2, window_bounds = array<i64: 1, 32>}, {pipeline_mode = #tpu.pipeline_mode<synchronous>, transform_indices = @transform_3, window_bounds = array<i64: 1, 32>}, {pipeline_mode = #tpu.pipeline_mode<synchronous>, transform_indices = @transform_4, window_bounds = array<i64: 32, 32>}, {pipeline_mode = #tpu.pipeline_mode<synchronous>, transform_indices = @transform_5, window_bounds = array<i64: 1, 32>}, {pipeline_mode = #tpu.pipeline_mode<synchronous>, transform_indices = @transform_6, window_bounds = array<i64: 32, 32>}, {pipeline_mode = #tpu.pipeline_mode<synchronous>, transform_indices = @transform_7, window_bounds = array<i64: 1, 32>}, {pipeline_mode = #tpu.pipeline_mode<synchronous>, transform_indices = @transform_8, window_bounds = array<i64: 32, 32>}, {pipeline_mode = #tpu.pipeline_mode<synchronous>, transform_indices = @transform_9, window_bounds = array<i64: 1, 32>}, {pipeline_mode = #tpu.pipeline_mode<synchronous>, transform_indices = @transform_10, window_bounds = array<i64: 32, 32>}, {pipeline_mode = #tpu.pipeline_mode<synchronous>, transform_indices = @transform_11, window_bounds = array<i64: 1, 32>}, {pipeline_mode = #tpu.pipeline_mode<synchronous>, transform_indices = @transform_12, window_bounds = array<i64: 1, 32>}, {pipeline_mode = #tpu.pipeline_mode<synchronous>, transform_indices = @transform_13, window_bounds = array<i64: 1, 32>}, {pipeline_mode = #tpu.pipeline_mode<synchronous>, transform_indices = @transform_14, window_bounds = array<i64: 32, 128>}, {pipeline_mode = #tpu.pipeline_mode<synchronous>, transform_indices = @transform_15, window_bounds = array<i64: 1, 128>}, {pipeline_mode = #tpu.pipeline_mode<synchronous>, transform_indices = @transform_16, window_bounds = array<i64: 128, 32>}, {pipeline_mode = #tpu.pipeline_mode<synchronous>, transform_indices = @transform_17, window_bounds = array<i64: 1, 32>}, {transform_indices = @transform_18, window_bounds = array<i64: 1, 8, 32>}]} {
    %c0_i32 = arith.constant 0 : i32
    %0 = arith.cmpi eq, %arg2, %c0_i32 : i32
    %1 = arith.extui %0 : i1 to i32
    %c0_i32_0 = arith.constant 0 : i32
    %2 = arith.cmpi ne, %1, %c0_i32_0 : i32
    scf.if %2 {
      %cst = arith.constant -1.000000e+30 : f32
      %12 = vector.broadcast %cst : f32 to vector<4x8x1xf32>
      %c0 = arith.constant 0 : index
      %c0_4 = arith.constant 0 : index
      %c0_5 = arith.constant 0 : index
      %13 = vector.load %arg23[%c0, %c0_4, %c0_5] : memref<4x8x1xf32, #tpu.memory_space<vmem>>, vector<4x8x1xf32>
      tpu.vector_store %arg23[%c0, %c0_4, %c0_5], %12 {strides = array<i32>} : memref<4x8x1xf32, #tpu.memory_space<vmem>>, vector<4x8x1xf32>,
      %cst_6 = arith.constant 0.000000e+00 : f32
      %14 = vector.broadcast %cst_6 : f32 to vector<4x8x1xf32>
      %c0_7 = arith.constant 0 : index
      %c0_8 = arith.constant 0 : index
      %c0_9 = arith.constant 0 : index
      %15 = vector.load %arg24[%c0_7, %c0_8, %c0_9] : memref<4x8x1xf32, #tpu.memory_space<vmem>>, vector<4x8x1xf32>
      tpu.vector_store %arg24[%c0_7, %c0_8, %c0_9], %14 {strides = array<i32>} : memref<4x8x1xf32, #tpu.memory_space<vmem>>, vector<4x8x1xf32>,
      %cst_10 = arith.constant 0.000000e+00 : f32
      %16 = vector.broadcast %cst_10 : f32 to vector<4x8x8xf32>
      %c0_11 = arith.constant 0 : index
      %c0_12 = arith.constant 0 : index
      %c0_13 = arith.constant 0 : index
      %17 = vector.load %arg25[%c0_11, %c0_12, %c0_13] : memref<4x8x8xf32, #tpu.memory_space<vmem>>, vector<4x8x8xf32>
      tpu.vector_store %arg25[%c0_11, %c0_12, %c0_13], %16 {strides = array<i32>} : memref<4x8x8xf32, #tpu.memory_space<vmem>>, vector<4x8x8xf32>,
      %c0_14 = arith.constant 0 : index
      %c0_15 = arith.constant 0 : index
      %c0_16 = arith.constant 0 : index
      %18 = vector.load %arg3[%c0_14, %c0_15, %c0_16] : memref<1x8x32xf32, #tpu.memory_space<vmem>>, vector<1x8x32xf32>
      %19 = vector.shape_cast %18 : vector<1x8x32xf32> to vector<8x32xf32>
      %c0_17 = arith.constant 0 : index
      %c0_18 = arith.constant 0 : index
      %20 = vector.load %arg5[%c0_17, %c0_18] : memref<1x32xf32, #tpu.memory_space<vmem>>, vector<1x32xf32>
      %21 = vector.shape_cast %20 : vector<1x32xf32> to vector<32xf32>
      %c0_19 = arith.constant 0 : index
      %c0_20 = arith.constant 0 : index
      %22 = vector.load %arg6[%c0_19, %c0_20] : memref<1x32xf32, #tpu.memory_space<vmem>>, vector<1x32xf32>
      %23 = vector.shape_cast %22 : vector<1x32xf32> to vector<32xf32>
      %cst_21 = arith.constant dense<0.000000e+00> : vector<8xf32>
      %24 = vector.multi_reduction <add>, %19, %cst_21 [1] : vector<8x32xf32> to vector<8xf32>
      %25 = vector.shape_cast %24 : vector<8xf32> to vector<8x1xf32>
      %cst_22 = arith.constant 3.200000e+01 : f32
      %26 = vector.broadcast %cst_22 : f32 to vector<8x1xf32>
      %27 = arith.divf %25, %26 : vector<8x1xf32>
      %28 = vector.broadcast %27 : vector<8x1xf32> to vector<8x32xf32>
      %29 = arith.subf %19, %28 : vector<8x32xf32>
      %30 = arith.mulf %29, %29 : vector<8x32xf32>
      %cst_23 = arith.constant dense<0.000000e+00> : vector<8xf32>
      %31 = vector.multi_reduction <add>, %30, %cst_23 [1] : vector<8x32xf32> to vector<8xf32>
      %32 = vector.shape_cast %31 : vector<8xf32> to vector<8x1xf32>
      %cst_24 = arith.constant 3.200000e+01 : f32
      %33 = vector.broadcast %cst_24 : f32 to vector<8x1xf32>
      %34 = arith.divf %32, %33 : vector<8x1xf32>
      %35 = vector.broadcast %27 : vector<8x1xf32> to vector<8x32xf32>
      %36 = arith.subf %19, %35 : vector<8x32xf32>
      %cst_25 = arith.constant 9.99999974E-6 : f32
      %37 = vector.broadcast %cst_25 : f32 to vector<8x1xf32>
      %38 = arith.addf %34, %37 : vector<8x1xf32>
      %39 = math.rsqrt %38 : vector<8x1xf32>
      %40 = vector.broadcast %39 : vector<8x1xf32> to vector<8x32xf32>
      %41 = arith.mulf %36, %40 : vector<8x32xf32>
      %42 = vector.shape_cast %21 : vector<32xf32> to vector<1x32xf32>
      %43 = vector.broadcast %42 : vector<1x32xf32> to vector<8x32xf32>
      %44 = arith.mulf %41, %43 : vector<8x32xf32>
      %45 = vector.shape_cast %23 : vector<32xf32> to vector<1x32xf32>
      %46 = vector.broadcast %45 : vector<1x32xf32> to vector<8x32xf32>
      %47 = arith.addf %44, %46 : vector<8x32xf32>
      %48 = arith.truncf %47 : vector<8x32xf32> to vector<8x32xbf16>
      %c0_26 = arith.constant 0 : index
      %c0_27 = arith.constant 0 : index
      %49 = vector.load %arg7[%c0_26, %c0_27] : memref<32x32xbf16, #tpu.memory_space<vmem>>, vector<32x32xbf16>
      %cst_28 = arith.constant dense<0.000000e+00> : vector<8x32xf32>
      %50 = tpu.matmul %48, %49, %cst_28 {dimension_numbers = #tpu.dot_dimension_numbers<[1], [0], [0], [1], [0, 0, 1, 1], [], []>} : vector<8x32xbf16>, vector<32x32xbf16>, vector<8x32xf32> -> vector<8x32xf32>
      %c0_29 = arith.constant 0 : index
      %c0_30 = arith.constant 0 : index
      %51 = vector.load %arg8[%c0_29, %c0_30] : memref<1x32xf32, #tpu.memory_space<vmem>>, vector<1x32xf32>
      %52 = vector.shape_cast %51 : vector<1x32xf32> to vector<32xf32>
      %53 = vector.shape_cast %52 : vector<32xf32> to vector<1x32xf32>
      %54 = vector.broadcast %53 : vector<1x32xf32> to vector<8x32xf32>
      %55 = arith.addf %50, %54 : vector<8x32xf32>
      %cst_31 = arith.constant 0.353553385 : f32
      %56 = vector.broadcast %cst_31 : f32 to vector<8x32xf32>
      %57 = arith.mulf %55, %56 : vector<8x32xf32>
      %58 = vector.extract_strided_slice %57 {offsets = [0, 0], sizes = [8, 8], strides = [1, 1]} : vector<8x32xf32> to vector<8x8xf32>
      %59 = vector.extract_strided_slice %57 {offsets = [0, 8], sizes = [8, 8], strides = [1, 1]} : vector<8x32xf32> to vector<8x8xf32>
      %60 = vector.extract_strided_slice %57 {offsets = [0, 16], sizes = [8, 8], strides = [1, 1]} : vector<8x32xf32> to vector<8x8xf32>
      %61 = vector.extract_strided_slice %57 {offsets = [0, 24], sizes = [8, 8], strides = [1, 1]} : vector<8x32xf32> to vector<8x8xf32>
      %62 = vector.shape_cast %58 : vector<8x8xf32> to vector<1x8x8xf32>
      %63 = vector.shape_cast %59 : vector<8x8xf32> to vector<1x8x8xf32>
      %64 = vector.shape_cast %60 : vector<8x8xf32> to vector<1x8x8xf32>
      %65 = vector.shape_cast %61 : vector<8x8xf32> to vector<1x8x8xf32>
      %66 = tpu.concatenate %62, %63, %64, %65 in 0 : vector<1x8x8xf32>, vector<1x8x8xf32>, vector<1x8x8xf32>, vector<1x8x8xf32> -> vector<4x8x8xf32>
      %67 = arith.truncf %66 : vector<4x8x8xf32> to vector<4x8x8xbf16>
      %c0_32 = arith.constant 0 : index
      %c0_33 = arith.constant 0 : index
      %c0_34 = arith.constant 0 : index
      %68 = vector.load %arg22[%c0_32, %c0_33, %c0_34] : memref<4x8x8xbf16, #tpu.memory_space<vmem>>, vector<4x8x8xbf16>
      tpu.vector_store %arg22[%c0_32, %c0_33, %c0_34], %67 {strides = array<i32>} : memref<4x8x8xbf16, #tpu.memory_space<vmem>>, vector<4x8x8xbf16>,
    } else {
    }
    %c8_i32 = arith.constant 8 : i32
    %3 = arith.muli %arg2, %c8_i32 : i32
    %c8_i32_1 = arith.constant 8 : i32
    %4 = arith.muli %arg1, %c8_i32_1 : i32
    %c7_i32 = arith.constant 7 : i32
    %5 = arith.addi %4, %c7_i32 : i32
    %6 = arith.cmpi sle, %3, %5 : i32
    %7 = arith.extui %6 : i1 to i32
    %c0_i32_2 = arith.constant 0 : i32
    %8 = arith.cmpi ne, %7, %c0_i32_2 : i32
    scf.if %8 {
      %c0 = arith.constant 0 : index
      %c0_4 = arith.constant 0 : index
      %c0_5 = arith.constant 0 : index
      %12 = vector.load %arg4[%c0, %c0_4, %c0_5] : memref<1x8x32xf32, #tpu.memory_space<vmem>>, vector<1x8x32xf32>
      %13 = vector.shape_cast %12 : vector<1x8x32xf32> to vector<8x32xf32>
      %c0_6 = arith.constant 0 : index
      %c0_7 = arith.constant 0 : index
      %14 = vector.load %arg5[%c0_6, %c0_7] : memref<1x32xf32, #tpu.memory_space<vmem>>, vector<1x32xf32>
      %15 = vector.shape_cast %14 : vector<1x32xf32> to vector<32xf32>
      %c0_8 = arith.constant 0 : index
      %c0_9 = arith.constant 0 : index
      %16 = vector.load %arg6[%c0_8, %c0_9] : memref<1x32xf32, #tpu.memory_space<vmem>>, vector<1x32xf32>
      %17 = vector.shape_cast %16 : vector<1x32xf32> to vector<32xf32>
      %cst = arith.constant dense<0.000000e+00> : vector<8xf32>
      %18 = vector.multi_reduction <add>, %13, %cst [1] : vector<8x32xf32> to vector<8xf32>
      %19 = vector.shape_cast %18 : vector<8xf32> to vector<8x1xf32>
      %cst_10 = arith.constant 3.200000e+01 : f32
      %20 = vector.broadcast %cst_10 : f32 to vector<8x1xf32>
      %21 = arith.divf %19, %20 : vector<8x1xf32>
      %22 = vector.broadcast %21 : vector<8x1xf32> to vector<8x32xf32>
      %23 = arith.subf %13, %22 : vector<8x32xf32>
      %24 = arith.mulf %23, %23 : vector<8x32xf32>
      %cst_11 = arith.constant dense<0.000000e+00> : vector<8xf32>
      %25 = vector.multi_reduction <add>, %24, %cst_11 [1] : vector<8x32xf32> to vector<8xf32>
      %26 = vector.shape_cast %25 : vector<8xf32> to vector<8x1xf32>
      %cst_12 = arith.constant 3.200000e+01 : f32
      %27 = vector.broadcast %cst_12 : f32 to vector<8x1xf32>
      %28 = arith.divf %26, %27 : vector<8x1xf32>
      %29 = vector.broadcast %21 : vector<8x1xf32> to vector<8x32xf32>
      %30 = arith.subf %13, %29 : vector<8x32xf32>
      %cst_13 = arith.constant 9.99999974E-6 : f32
      %31 = vector.broadcast %cst_13 : f32 to vector<8x1xf32>
      %32 = arith.addf %28, %31 : vector<8x1xf32>
      %33 = math.rsqrt %32 : vector<8x1xf32>
      %34 = vector.broadcast %33 : vector<8x1xf32> to vector<8x32xf32>
      %35 = arith.mulf %30, %34 : vector<8x32xf32>
      %36 = vector.shape_cast %15 : vector<32xf32> to vector<1x32xf32>
      %37 = vector.broadcast %36 : vector<1x32xf32> to vector<8x32xf32>
      %38 = arith.mulf %35, %37 : vector<8x32xf32>
      %39 = vector.shape_cast %17 : vector<32xf32> to vector<1x32xf32>
      %40 = vector.broadcast %39 : vector<1x32xf32> to vector<8x32xf32>
      %41 = arith.addf %38, %40 : vector<8x32xf32>
      %42 = arith.truncf %41 : vector<8x32xf32> to vector<8x32xbf16>
      %c0_14 = arith.constant 0 : index
      %c0_15 = arith.constant 0 : index
      %43 = vector.load %arg9[%c0_14, %c0_15] : memref<32x32xbf16, #tpu.memory_space<vmem>>, vector<32x32xbf16>
      %cst_16 = arith.constant dense<0.000000e+00> : vector<8x32xf32>
      %44 = tpu.matmul %42, %43, %cst_16 {dimension_numbers = #tpu.dot_dimension_numbers<[1], [0], [0], [1], [0, 0, 1, 1], [], []>} : vector<8x32xbf16>, vector<32x32xbf16>, vector<8x32xf32> -> vector<8x32xf32>
      %c0_17 = arith.constant 0 : index
      %c0_18 = arith.constant 0 : index
      %45 = vector.load %arg10[%c0_17, %c0_18] : memref<1x32xf32, #tpu.memory_space<vmem>>, vector<1x32xf32>
      %46 = vector.shape_cast %45 : vector<1x32xf32> to vector<32xf32>
      %47 = vector.shape_cast %46 : vector<32xf32> to vector<1x32xf32>
      %48 = vector.broadcast %47 : vector<1x32xf32> to vector<8x32xf32>
      %49 = arith.addf %44, %48 : vector<8x32xf32>
      %c0_19 = arith.constant 0 : index
      %c0_20 = arith.constant 0 : index
      %50 = vector.load %arg11[%c0_19, %c0_20] : memref<32x32xbf16, #tpu.memory_space<vmem>>, vector<32x32xbf16>
      %cst_21 = arith.constant dense<0.000000e+00> : vector<8x32xf32>
      %51 = tpu.matmul %42, %50, %cst_21 {dimension_numbers = #tpu.dot_dimension_numbers<[1], [0], [0], [1], [0, 0, 1, 1], [], []>} : vector<8x32xbf16>, vector<32x32xbf16>, vector<8x32xf32> -> vector<8x32xf32>
      %c0_22 = arith.constant 0 : index
      %c0_23 = arith.constant 0 : index
      %52 = vector.load %arg12[%c0_22, %c0_23] : memref<1x32xf32, #tpu.memory_space<vmem>>, vector<1x32xf32>
      %53 = vector.shape_cast %52 : vector<1x32xf32> to vector<32xf32>
      %54 = vector.shape_cast %53 : vector<32xf32> to vector<1x32xf32>
      %55 = vector.broadcast %54 : vector<1x32xf32> to vector<8x32xf32>
      %56 = arith.addf %51, %55 : vector<8x32xf32>
      %57 = vector.extract_strided_slice %49 {offsets = [0, 0], sizes = [8, 8], strides = [1, 1]} : vector<8x32xf32> to vector<8x8xf32>
      %58 = vector.extract_strided_slice %49 {offsets = [0, 8], sizes = [8, 8], strides = [1, 1]} : vector<8x32xf32> to vector<8x8xf32>
      %59 = vector.extract_strided_slice %49 {offsets = [0, 16], sizes = [8, 8], strides = [1, 1]} : vector<8x32xf32> to vector<8x8xf32>
      %60 = vector.extract_strided_slice %49 {offsets = [0, 24], sizes = [8, 8], strides = [1, 1]} : vector<8x32xf32> to vector<8x8xf32>
      %61 = vector.shape_cast %57 : vector<8x8xf32> to vector<1x8x8xf32>
      %62 = vector.shape_cast %58 : vector<8x8xf32> to vector<1x8x8xf32>
      %63 = vector.shape_cast %59 : vector<8x8xf32> to vector<1x8x8xf32>
      %64 = vector.shape_cast %60 : vector<8x8xf32> to vector<1x8x8xf32>
      %65 = tpu.concatenate %61, %62, %63, %64 in 0 : vector<1x8x8xf32>, vector<1x8x8xf32>, vector<1x8x8xf32>, vector<1x8x8xf32> -> vector<4x8x8xf32>
      %66 = arith.truncf %65 : vector<4x8x8xf32> to vector<4x8x8xbf16>
      %67 = vector.extract_strided_slice %56 {offsets = [0, 0], sizes = [8, 8], strides = [1, 1]} : vector<8x32xf32> to vector<8x8xf32>
      %68 = vector.extract_strided_slice %56 {offsets = [0, 8], sizes = [8, 8], strides = [1, 1]} : vector<8x32xf32> to vector<8x8xf32>
      %69 = vector.extract_strided_slice %56 {offsets = [0, 16], sizes = [8, 8], strides = [1, 1]} : vector<8x32xf32> to vector<8x8xf32>
      %70 = vector.extract_strided_slice %56 {offsets = [0, 24], sizes = [8, 8], strides = [1, 1]} : vector<8x32xf32> to vector<8x8xf32>
      %71 = vector.shape_cast %67 : vector<8x8xf32> to vector<1x8x8xf32>
      %72 = vector.shape_cast %68 : vector<8x8xf32> to vector<1x8x8xf32>
      %73 = vector.shape_cast %69 : vector<8x8xf32> to vector<1x8x8xf32>
      %74 = vector.shape_cast %70 : vector<8x8xf32> to vector<1x8x8xf32>
      %75 = tpu.concatenate %71, %72, %73, %74 in 0 : vector<1x8x8xf32>, vector<1x8x8xf32>, vector<1x8x8xf32>, vector<1x8x8xf32> -> vector<4x8x8xf32>
      %76 = arith.truncf %75 : vector<4x8x8xf32> to vector<4x8x8xbf16>
      %c0_24 = arith.constant 0 : index
      %c0_25 = arith.constant 0 : index
      %c0_26 = arith.constant 0 : index
      %77 = vector.load %arg22[%c0_24, %c0_25, %c0_26] : memref<4x8x8xbf16, #tpu.memory_space<vmem>>, vector<4x8x8xbf16>
      "tpu.trace_start"() <{level = 10 : i32, message = "hqd,hkd->hqk"}> : () -> ()
      %cst_27 = arith.constant dense<0.000000e+00> : vector<4x8x8xf32>
      %78 = tpu.matmul %77, %66, %cst_27 {dimension_numbers = #tpu.dot_dimension_numbers<[2], [2], [1], [1], [0, 0, 0, 1, 1, 1], [0], [0]>} : vector<4x8x8xbf16>, vector<4x8x8xbf16>, vector<4x8x8xf32> -> vector<4x8x8xf32>
      "tpu.trace_stop"() : () -> ()
      %c8_i32_28 = arith.constant 8 : i32
      %79 = arith.muli %arg1, %c8_i32_28 : i32
      %80 = tpu.iota {dimensions = array<i32: 0>} : vector<8x8xi32>
      %81 = vector.broadcast %79 : i32 to vector<8x8xi32>
      %82 = arith.addi %81, %80 : vector<8x8xi32>
      %c8_i32_29 = arith.constant 8 : i32
      %83 = arith.muli %arg2, %c8_i32_29 : i32
      %84 = tpu.iota {dimensions = array<i32: 1>} : vector<8x8xi32>
      %85 = vector.broadcast %83 : i32 to vector<8x8xi32>
      %86 = arith.addi %85, %84 : vector<8x8xi32>
      %87 = arith.cmpi sge, %82, %86 : vector<8x8xi32>
      %88 = vector.shape_cast %87 : vector<8x8xi1> to vector<1x8x8xi1>
      %cst_30 = arith.constant -1.000000e+30 : f32
      %89 = vector.shape_cast %88 : vector<1x8x8xi1> to vector<1x8x8xi1>
      %90 = vector.broadcast %89 : vector<1x8x8xi1> to vector<4x8x8xi1>
      %91 = vector.broadcast %cst_30 : f32 to vector<4x8x8xf32>
      %92 = arith.select %90, %78, %91 : vector<4x8x8xi1>, vector<4x8x8xf32>
      %c0_31 = arith.constant 0 : index
      %c0_32 = arith.constant 0 : index
      %c0_33 = arith.constant 0 : index
      %93 = vector.load %arg23[%c0_31, %c0_32, %c0_33] : memref<4x8x1xf32, #tpu.memory_space<vmem>>, vector<4x8x1xf32>
      %cst_34 = arith.constant dense<0xFF800000> : vector<4x8xf32>
      %94 = vector.multi_reduction <maximumf>, %92, %cst_34 [2] : vector<4x8x8xf32> to vector<4x8xf32>
      %95 = vector.shape_cast %94 : vector<4x8xf32> to vector<4x8x1xf32>
      %96 = arith.maximumf %93, %95 : vector<4x8x1xf32>
      %97 = arith.subf %93, %96 : vector<4x8x1xf32>
      %98 = math.exp %97 : vector<4x8x1xf32>
      %99 = vector.broadcast %96 : vector<4x8x1xf32> to vector<4x8x8xf32>
      %100 = arith.subf %92, %99 : vector<4x8x8xf32>
      %101 = math.exp %100 : vector<4x8x8xf32>
      %c0_35 = arith.constant 0 : index
      %c0_36 = arith.constant 0 : index
      %c0_37 = arith.constant 0 : index
      %102 = vector.load %arg24[%c0_35, %c0_36, %c0_37] : memref<4x8x1xf32, #tpu.memory_space<vmem>>, vector<4x8x1xf32>
      %103 = arith.mulf %98, %102 : vector<4x8x1xf32>
      %cst_38 = arith.constant dense<0.000000e+00> : vector<4x8xf32>
      %104 = vector.multi_reduction <add>, %101, %cst_38 [2] : vector<4x8x8xf32> to vector<4x8xf32>
      %105 = vector.shape_cast %104 : vector<4x8xf32> to vector<4x8x1xf32>
      %106 = arith.addf %103, %105 : vector<4x8x1xf32>
      %c0_39 = arith.constant 0 : index
      %c0_40 = arith.constant 0 : index
      %c0_41 = arith.constant 0 : index
      %107 = vector.load %arg24[%c0_39, %c0_40, %c0_41] : memref<4x8x1xf32, #tpu.memory_space<vmem>>, vector<4x8x1xf32>
      tpu.vector_store %arg24[%c0_39, %c0_40, %c0_41], %106 {strides = array<i32>} : memref<4x8x1xf32, #tpu.memory_space<vmem>>, vector<4x8x1xf32>,
      %c0_42 = arith.constant 0 : index
      %c0_43 = arith.constant 0 : index
      %c0_44 = arith.constant 0 : index
      %108 = vector.load %arg25[%c0_42, %c0_43, %c0_44] : memref<4x8x8xf32, #tpu.memory_space<vmem>>, vector<4x8x8xf32>
      %109 = vector.broadcast %98 : vector<4x8x1xf32> to vector<4x8x8xf32>
      %110 = arith.mulf %109, %108 : vector<4x8x8xf32>
      %111 = arith.truncf %101 : vector<4x8x8xf32> to vector<4x8x8xbf16>
      "tpu.trace_start"() <{level = 10 : i32, message = "hqk,hkd->hqd"}> : () -> ()
      %cst_45 = arith.constant dense<0.000000e+00> : vector<4x8x8xf32>
      %112 = tpu.matmul %111, %76, %cst_45 {dimension_numbers = #tpu.dot_dimension_numbers<[2], [1], [1], [2], [0, 0, 0, 1, 1, 2], [0], [0]>} : vector<4x8x8xbf16>, vector<4x8x8xbf16>, vector<4x8x8xf32> -> vector<4x8x8xf32>
      "tpu.trace_stop"() : () -> ()
      %113 = arith.addf %110, %112 : vector<4x8x8xf32>
      %c0_46 = arith.constant 0 : index
      %c0_47 = arith.constant 0 : index
      %c0_48 = arith.constant 0 : index
      %114 = vector.load %arg25[%c0_46, %c0_47, %c0_48] : memref<4x8x8xf32, #tpu.memory_space<vmem>>, vector<4x8x8xf32>
      tpu.vector_store %arg25[%c0_46, %c0_47, %c0_48], %113 {strides = array<i32>} : memref<4x8x8xf32, #tpu.memory_space<vmem>>, vector<4x8x8xf32>,
      %c0_49 = arith.constant 0 : index
      %c0_50 = arith.constant 0 : index
      %c0_51 = arith.constant 0 : index
      %115 = vector.load %arg23[%c0_49, %c0_50, %c0_51] : memref<4x8x1xf32, #tpu.memory_space<vmem>>, vector<4x8x1xf32>
      tpu.vector_store %arg23[%c0_49, %c0_50, %c0_51], %96 {strides = array<i32>} : memref<4x8x1xf32, #tpu.memory_space<vmem>>, vector<4x8x1xf32>,
    } else {
    }
    %c1_i32 = arith.constant 1 : i32
    %9 = arith.cmpi eq, %arg2, %c1_i32 : i32
    %10 = arith.extui %9 : i1 to i32
    %c0_i32_3 = arith.constant 0 : i32
    %11 = arith.cmpi ne, %10, %c0_i32_3 : i32
    scf.if %11 {
      %c0 = arith.constant 0 : index
      %c0_4 = arith.constant 0 : index
      %c0_5 = arith.constant 0 : index
      %12 = vector.load %arg25[%c0, %c0_4, %c0_5] : memref<4x8x8xf32, #tpu.memory_space<vmem>>, vector<4x8x8xf32>
      %c0_6 = arith.constant 0 : index
      %c0_7 = arith.constant 0 : index
      %c0_8 = arith.constant 0 : index
      %13 = vector.load %arg24[%c0_6, %c0_7, %c0_8] : memref<4x8x1xf32, #tpu.memory_space<vmem>>, vector<4x8x1xf32>
      %14 = tpu.reciprocal %13 {approx = true} : vector<4x8x1xf32> -> vector<4x8x1xf32>
      %15 = vector.broadcast %14 : vector<4x8x1xf32> to vector<4x8x8xf32>
      %16 = arith.mulf %12, %15 : vector<4x8x8xf32>
      %17 = vector.extract_strided_slice %16 {offsets = [0, 0, 0], sizes = [1, 8, 8], strides = [1, 1, 1]} : vector<4x8x8xf32> to vector<1x8x8xf32>
      %18 = vector.shape_cast %17 : vector<1x8x8xf32> to vector<8x8xf32>
      %19 = vector.extract_strided_slice %16 {offsets = [1, 0, 0], sizes = [1, 8, 8], strides = [1, 1, 1]} : vector<4x8x8xf32> to vector<1x8x8xf32>
      %20 = vector.shape_cast %19 : vector<1x8x8xf32> to vector<8x8xf32>
      %21 = vector.extract_strided_slice %16 {offsets = [2, 0, 0], sizes = [1, 8, 8], strides = [1, 1, 1]} : vector<4x8x8xf32> to vector<1x8x8xf32>
      %22 = vector.shape_cast %21 : vector<1x8x8xf32> to vector<8x8xf32>
      %23 = vector.extract_strided_slice %16 {offsets = [3, 0, 0], sizes = [1, 8, 8], strides = [1, 1, 1]} : vector<4x8x8xf32> to vector<1x8x8xf32>
      %24 = vector.shape_cast %23 : vector<1x8x8xf32> to vector<8x8xf32>
      %25 = tpu.concatenate %18, %20, %22, %24 in 1 : vector<8x8xf32>, vector<8x8xf32>, vector<8x8xf32>, vector<8x8xf32> -> vector<8x32xf32>
      %26 = arith.truncf %25 : vector<8x32xf32> to vector<8x32xbf16>
      %c0_9 = arith.constant 0 : index
      %c0_10 = arith.constant 0 : index
      %27 = vector.load %arg13[%c0_9, %c0_10] : memref<32x32xbf16, #tpu.memory_space<vmem>>, vector<32x32xbf16>
      %cst = arith.constant dense<0.000000e+00> : vector<8x32xf32>
      %28 = tpu.matmul %26, %27, %cst {dimension_numbers = #tpu.dot_dimension_numbers<[1], [0], [0], [1], [0, 0, 1, 1], [], []>} : vector<8x32xbf16>, vector<32x32xbf16>, vector<8x32xf32> -> vector<8x32xf32>
      %c0_11 = arith.constant 0 : index
      %c0_12 = arith.constant 0 : index
      %29 = vector.load %arg14[%c0_11, %c0_12] : memref<1x32xf32, #tpu.memory_space<vmem>>, vector<1x32xf32>
      %30 = vector.shape_cast %29 : vector<1x32xf32> to vector<32xf32>
      %31 = vector.shape_cast %30 : vector<32xf32> to vector<1x32xf32>
      %32 = vector.broadcast %31 : vector<1x32xf32> to vector<8x32xf32>
      %33 = arith.addf %28, %32 : vector<8x32xf32>
      %c0_13 = arith.constant 0 : index
      %c0_14 = arith.constant 0 : index
      %c0_15 = arith.constant 0 : index
      %34 = vector.load %arg3[%c0_13, %c0_14, %c0_15] : memref<1x8x32xf32, #tpu.memory_space<vmem>>, vector<1x8x32xf32>
      %35 = vector.shape_cast %34 : vector<1x8x32xf32> to vector<8x32xf32>
      %36 = arith.addf %35, %33 : vector<8x32xf32>
      %c0_16 = arith.constant 0 : index
      %c0_17 = arith.constant 0 : index
      %37 = vector.load %arg15[%c0_16, %c0_17] : memref<1x32xf32, #tpu.memory_space<vmem>>, vector<1x32xf32>
      %38 = vector.shape_cast %37 : vector<1x32xf32> to vector<32xf32>
      %c0_18 = arith.constant 0 : index
      %c0_19 = arith.constant 0 : index
      %39 = vector.load %arg16[%c0_18, %c0_19] : memref<1x32xf32, #tpu.memory_space<vmem>>, vector<1x32xf32>
      %40 = vector.shape_cast %39 : vector<1x32xf32> to vector<32xf32>
      %cst_20 = arith.constant dense<0.000000e+00> : vector<8xf32>
      %41 = vector.multi_reduction <add>, %36, %cst_20 [1] : vector<8x32xf32> to vector<8xf32>
      %42 = vector.shape_cast %41 : vector<8xf32> to vector<8x1xf32>
      %cst_21 = arith.constant 3.200000e+01 : f32
      %43 = vector.broadcast %cst_21 : f32 to vector<8x1xf32>
      %44 = arith.divf %42, %43 : vector<8x1xf32>
      %45 = vector.broadcast %44 : vector<8x1xf32> to vector<8x32xf32>
      %46 = arith.subf %36, %45 : vector<8x32xf32>
      %47 = arith.mulf %46, %46 : vector<8x32xf32>
      %cst_22 = arith.constant dense<0.000000e+00> : vector<8xf32>
      %48 = vector.multi_reduction <add>, %47, %cst_22 [1] : vector<8x32xf32> to vector<8xf32>
      %49 = vector.shape_cast %48 : vector<8xf32> to vector<8x1xf32>
      %cst_23 = arith.constant 3.200000e+01 : f32
      %50 = vector.broadcast %cst_23 : f32 to vector<8x1xf32>
      %51 = arith.divf %49, %50 : vector<8x1xf32>
      %52 = vector.broadcast %44 : vector<8x1xf32> to vector<8x32xf32>
      %53 = arith.subf %36, %52 : vector<8x32xf32>
      %cst_24 = arith.constant 9.99999974E-6 : f32
      %54 = vector.broadcast %cst_24 : f32 to vector<8x1xf32>
      %55 = arith.addf %51, %54 : vector<8x1xf32>
      %56 = math.rsqrt %55 : vector<8x1xf32>
      %57 = vector.broadcast %56 : vector<8x1xf32> to vector<8x32xf32>
      %58 = arith.mulf %53, %57 : vector<8x32xf32>
      %59 = vector.shape_cast %38 : vector<32xf32> to vector<1x32xf32>
      %60 = vector.broadcast %59 : vector<1x32xf32> to vector<8x32xf32>
      %61 = arith.mulf %58, %60 : vector<8x32xf32>
      %62 = vector.shape_cast %40 : vector<32xf32> to vector<1x32xf32>
      %63 = vector.broadcast %62 : vector<1x32xf32> to vector<8x32xf32>
      %64 = arith.addf %61, %63 : vector<8x32xf32>
      %65 = arith.truncf %64 : vector<8x32xf32> to vector<8x32xbf16>
      %c0_25 = arith.constant 0 : index
      %c0_26 = arith.constant 0 : index
      %66 = vector.load %arg17[%c0_25, %c0_26] : memref<32x128xbf16, #tpu.memory_space<vmem>>, vector<32x128xbf16>
      %cst_27 = arith.constant dense<0.000000e+00> : vector<8x128xf32>
      %67 = tpu.matmul %65, %66, %cst_27 {dimension_numbers = #tpu.dot_dimension_numbers<[1], [0], [0], [1], [0, 0, 1, 1], [], []>} : vector<8x32xbf16>, vector<32x128xbf16>, vector<8x128xf32> -> vector<8x128xf32>
      %c0_28 = arith.constant 0 : index
      %c0_29 = arith.constant 0 : index
      %68 = vector.load %arg18[%c0_28, %c0_29] : memref<1x128xf32, #tpu.memory_space<vmem>>, vector<1x128xf32>
      %69 = vector.shape_cast %68 : vector<1x128xf32> to vector<128xf32>
      %70 = vector.shape_cast %69 : vector<128xf32> to vector<1x128xf32>
      %71 = vector.broadcast %70 : vector<1x128xf32> to vector<8x128xf32>
      %72 = arith.addf %67, %71 : vector<8x128xf32>
      %cst_30 = arith.constant 5.000000e-01 : f32
      %73 = vector.broadcast %cst_30 : f32 to vector<8x128xf32>
      %74 = arith.mulf %73, %72 : vector<8x128xf32>
      %cst_31 = arith.constant 4.471500e-02 : f32
      %75 = vector.broadcast %cst_31 : f32 to vector<8x128xf32>
      %76 = arith.mulf %75, %72 : vector<8x128xf32>
      %77 = arith.mulf %76, %72 : vector<8x128xf32>
      %78 = arith.mulf %77, %72 : vector<8x128xf32>
      %79 = arith.addf %72, %78 : vector<8x128xf32>
      %cst_32 = arith.constant 0.797884583 : f32
      %80 = vector.broadcast %cst_32 : f32 to vector<8x128xf32>
      %81 = arith.mulf %80, %79 : vector<8x128xf32>
      %82 = math.tanh %81 : vector<8x128xf32>
      %cst_33 = arith.constant 1.000000e+00 : f32
      %83 = vector.broadcast %cst_33 : f32 to vector<8x128xf32>
      %84 = arith.addf %83, %82 : vector<8x128xf32>
      %85 = arith.mulf %74, %84 : vector<8x128xf32>
      %86 = arith.truncf %85 : vector<8x128xf32> to vector<8x128xbf16>
      %c0_34 = arith.constant 0 : index
      %c0_35 = arith.constant 0 : index
      %87 = vector.load %arg19[%c0_34, %c0_35] : memref<128x32xbf16, #tpu.memory_space<vmem>>, vector<128x32xbf16>
      %cst_36 = arith.constant dense<0.000000e+00> : vector<8x32xf32>
      %88 = tpu.matmul %86, %87, %cst_36 {dimension_numbers = #tpu.dot_dimension_numbers<[1], [0], [0], [1], [0, 0, 1, 1], [], []>} : vector<8x128xbf16>, vector<128x32xbf16>, vector<8x32xf32> -> vector<8x32xf32>
      %c0_37 = arith.constant 0 : index
      %c0_38 = arith.constant 0 : index
      %89 = vector.load %arg20[%c0_37, %c0_38] : memref<1x32xf32, #tpu.memory_space<vmem>>, vector<1x32xf32>
      %90 = vector.shape_cast %89 : vector<1x32xf32> to vector<32xf32>
      %91 = vector.shape_cast %90 : vector<32xf32> to vector<1x32xf32>
      %92 = vector.broadcast %91 : vector<1x32xf32> to vector<8x32xf32>
      %93 = arith.addf %88, %92 : vector<8x32xf32>
      %94 = arith.addf %36, %93 : vector<8x32xf32>
      %c0_39 = arith.constant 0 : index
      %c0_40 = arith.constant 0 : index
      %c0_41 = arith.constant 0 : index
      %95 = vector.load %arg21[%c0_39, %c0_40, %c0_41] : memref<1x8x32xf32, #tpu.memory_space<vmem>>, vector<1x8x32xf32>
      %96 = vector.shape_cast %95 : vector<1x8x32xf32> to vector<8x32xf32>
      %97 = vector.shape_cast %94 : vector<8x32xf32> to vector<1x8x32xf32>
      tpu.vector_store %arg21[%c0_39, %c0_40, %c0_41], %97 {strides = array<i32>} : memref<1x8x32xf32, #tpu.memory_space<vmem>>, vector<1x8x32xf32>,
    } else {
    }
    return
  }
  func.func @transform_0(%arg0: i32, %arg1: i32, %arg2: i32) -> (i32, i32, i32) {
    %c0_i32 = arith.constant 0 : i32
    %c0_i32_0 = arith.constant 0 : i32
    return %arg0, %arg1, %c0_i32 : i32, i32, i32
  }
  func.func @transform_1(%arg0: i32, %arg1: i32, %arg2: i32) -> (i32, i32, i32) {
    %c0_i32 = arith.constant 0 : i32
    %c0_i32_0 = arith.constant 0 : i32
    return %arg0, %arg2, %c0_i32 : i32, i32, i32
  }
  func.func @transform_2(%arg0: i32, %arg1: i32, %arg2: i32) -> (i32, i32) {
    %c0_i32 = arith.constant 0 : i32
    %c0_i32_0 = arith.constant 0 : i32
    %c0_i32_1 = arith.constant 0 : i32
    return %c0_i32, %c0_i32_0 : i32, i32
  }
  func.func @transform_3(%arg0: i32, %arg1: i32, %arg2: i32) -> (i32, i32) {
    %c0_i32 = arith.constant 0 : i32
    %c0_i32_0 = arith.constant 0 : i32
    %c0_i32_1 = arith.constant 0 : i32
    return %c0_i32, %c0_i32_0 : i32, i32
  }
  func.func @transform_4(%arg0: i32, %arg1: i32, %arg2: i32) -> (i32, i32) {
    %c0_i32 = arith.constant 0 : i32
    %c0_i32_0 = arith.constant 0 : i32
    %c0_i32_1 = arith.constant 0 : i32
    return %c0_i32, %c0_i32_0 : i32, i32
  }
  func.func @transform_5(%arg0: i32, %arg1: i32, %arg2: i32) -> (i32, i32) {
    %c0_i32 = arith.constant 0 : i32
    %c0_i32_0 = arith.constant 0 : i32
    %c0_i32_1 = arith.constant 0 : i32
    return %c0_i32, %c0_i32_0 : i32, i32
  }
  func.func @transform_6(%arg0: i32, %arg1: i32, %arg2: i32) -> (i32, i32) {
    %c0_i32 = arith.constant 0 : i32
    %c0_i32_0 = arith.constant 0 : i32
    %c0_i32_1 = arith.constant 0 : i32
    return %c0_i32, %c0_i32_0 : i32, i32
  }
  func.func @transform_7(%arg0: i32, %arg1: i32, %arg2: i32) -> (i32, i32) {
    %c0_i32 = arith.constant 0 : i32
    %c0_i32_0 = arith.constant 0 : i32
    %c0_i32_1 = arith.constant 0 : i32
    return %c0_i32, %c0_i32_0 : i32, i32
  }
  func.func @transform_8(%arg0: i32, %arg1: i32, %arg2: i32) -> (i32, i32) {
    %c0_i32 = arith.constant 0 : i32
    %c0_i32_0 = arith.constant 0 : i32
    %c0_i32_1 = arith.constant 0 : i32
    return %c0_i32, %c0_i32_0 : i32, i32
  }
  func.func @transform_9(%arg0: i32, %arg1: i32, %arg2: i32) -> (i32, i32) {
    %c0_i32 = arith.constant 0 : i32
    %c0_i32_0 = arith.constant 0 : i32
    %c0_i32_1 = arith.constant 0 : i32
    return %c0_i32, %c0_i32_0 : i32, i32
  }
  func.func @transform_10(%arg0: i32, %arg1: i32, %arg2: i32) -> (i32, i32) {
    %c0_i32 = arith.constant 0 : i32
    %c0_i32_0 = arith.constant 0 : i32
    %c0_i32_1 = arith.constant 0 : i32
    return %c0_i32, %c0_i32_0 : i32, i32
  }
  func.func @transform_11(%arg0: i32, %arg1: i32, %arg2: i32) -> (i32, i32) {
    %c0_i32 = arith.constant 0 : i32
    %c0_i32_0 = arith.constant 0 : i32
    %c0_i32_1 = arith.constant 0 : i32
    return %c0_i32, %c0_i32_0 : i32, i32
  }
  func.func @transform_12(%arg0: i32, %arg1: i32, %arg2: i32) -> (i32, i32) {
    %c0_i32 = arith.constant 0 : i32
    %c0_i32_0 = arith.constant 0 : i32
    %c0_i32_1 = arith.constant 0 : i32
    return %c0_i32, %c0_i32_0 : i32, i32
  }
  func.func @transform_13(%arg0: i32, %arg1: i32, %arg2: i32) -> (i32, i32) {
    %c0_i32 = arith.constant 0 : i32
    %c0_i32_0 = arith.constant 0 : i32
    %c0_i32_1 = arith.constant 0 : i32
    return %c0_i32, %c0_i32_0 : i32, i32
  }
  func.func @transform_14(%arg0: i32, %arg1: i32, %arg2: i32) -> (i32, i32) {
    %c0_i32 = arith.constant 0 : i32
    %c0_i32_0 = arith.constant 0 : i32
    %c0_i32_1 = arith.constant 0 : i32
    return %c0_i32, %c0_i32_0 : i32, i32
  }
  func.func @transform_15(%arg0: i32, %arg1: i32, %arg2: i32) -> (i32, i32) {
    %c0_i32 = arith.constant 0 : i32
    %c0_i32_0 = arith.constant 0 : i32
    %c0_i32_1 = arith.constant 0 : i32
    return %c0_i32, %c0_i32_0 : i32, i32
  }
  func.func @transform_16(%arg0: i32, %arg1: i32, %arg2: i32) -> (i32, i32) {
    %c0_i32 = arith.constant 0 : i32
    %c0_i32_0 = arith.constant 0 : i32
    %c0_i32_1 = arith.constant 0 : i32
    return %c0_i32, %c0_i32_0 : i32, i32
  }
  func.func @transform_17(%arg0: i32, %arg1: i32, %arg2: i32) -> (i32, i32) {
    %c0_i32 = arith.constant 0 : i32
    %c0_i32_0 = arith.constant 0 : i32
    %c0_i32_1 = arith.constant 0 : i32
    return %c0_i32, %c0_i32_0 : i32, i32
  }
  func.func @transform_18(%arg0: i32, %arg1: i32, %arg2: i32) -> (i32, i32, i32) {
    %c0_i32 = arith.constant 0 : i32
    %c0_i32_0 = arith.constant 0 : i32
    return %arg0, %arg1, %c0_i32 : i32, i32, i32
  }
}

</mosaic_0001>

<llo_original>
// kernel: tpu_custom_call.1
$region0: #{tpu_custom_call.1}
  #allocation0 [shape = 'u32[]', space=smem, size = 0x4, offset = 0x4, fixed_abs, tag = 'smem constant byte address 0x4 - core index']
  #allocation1 [shape = 'u32[144,128]{1,0:T(1,128)}', space=vmem, size = 0x12000, scoped, tag = 'internal scratch']
  #allocation2 [shape = 'bf16[4,8,8]{2,1,0:T(8,128)(2,1)}', space=vmem, size = 0x2000, scoped, tag = 'scratch operand']
  #allocation3 [shape = 'f32[4,8,1]{2,1,0:T(8,128)}', space=vmem, size = 0x4000, scoped, tag = 'scratch operand']
  #allocation4 [shape = 'f32[4,8,1]{2,1,0:T(8,128)}', space=vmem, size = 0x4000, scoped, tag = 'scratch operand']
  #allocation5 [shape = 'f32[4,8,8]{2,1,0:T(8,128)}', space=vmem, size = 0x4000, scoped, tag = 'scratch operand']
  %s0 = inlined_call_operand.vmem [shape: f32[2,16,32], index: 0, kind: input, shape index: {}]
  %s1 = inlined_call_operand.vmem [shape: f32[2,16,32], index: 1, kind: input, shape index: {}]
  %s2 = inlined_call_operand.vmem [shape: f32[1,32], index: 2, kind: input, shape index: {}]
  %s3 = inlined_call_operand.hbm [shape: f32[1,32], index: 3, kind: input, shape index: {}]
  %s4 = inlined_call_operand.vmem [shape: bf16[32,32], index: 4, kind: input, shape index: {}]
  %s5 = inlined_call_operand.hbm [shape: f32[1,32], index: 5, kind: input, shape index: {}]
  %s6 = inlined_call_operand.hbm [shape: bf16[32,32], index: 6, kind: input, shape index: {}]
  %s7 = inlined_call_operand.hbm [shape: f32[1,32], index: 7, kind: input, shape index: {}]
  %s8 = inlined_call_operand.hbm [shape: bf16[32,32], index: 8, kind: input, shape index: {}]
  %s9 = inlined_call_operand.hbm [shape: f32[1,32], index: 9, kind: input, shape index: {}]
  %s10 = inlined_call_operand.vmem [shape: bf16[32,32], index: 10, kind: input, shape index: {}]
  %s11 = inlined_call_operand.hbm [shape: f32[1,32], index: 11, kind: input, shape index: {}]
  %s12 = inlined_call_operand.hbm [shape: f32[1,32], index: 12, kind: input, shape index: {}]
  %s13 = inlined_call_operand.hbm [shape: f32[1,32], index: 13, kind: input, shape index: {}]
  %s14 = inlined_call_operand.vmem [shape: bf16[32,128], index: 14, kind: input, shape index: {}]
  %s15 = inlined_call_operand.vmem [shape: f32[1,128], index: 15, kind: input, shape index: {}]
  %s16 = inlined_call_operand.vmem [shape: bf16[128,32], index: 16, kind: input, shape index: {}]
  %s17 = inlined_call_operand.vmem [shape: f32[1,32], index: 17, kind: input, shape index: {}]
  %s18 = inlined_call_operand.hbm [shape: f32[2,16,32], index: 18, kind: output, shape index: {}]
  %s19 = sld [smem:[#allocation0]]
  $region153: #{tpu_custom_call.1} parent=0
    _
  %s21 = ssub.s32 1, %s19
  %s22 = scalar_select 0, %s21, %s19
  $region1: #{tpu_custom_call.1} parent=0
    #allocation6 [shape = 'u8[512]{0}', space=vmem, size = 0x400, scoped, tag = 'input window, operand 3, single buffered']
    #allocation7 [shape = 's32[2]{0}', space=sflag, size = 0x8, scoped, tag = 'scoped memory for tpu_custom_call.1']
    #allocation8 [shape = 's32[2]{0}', space=sflag, size = 0x8, scoped, tag = 'scoped memory for tpu_custom_call.1']
    #allocation9 [shape = 'u8[512]{0}', space=vmem, size = 0x400, scoped, tag = 'input window, operand 5, single buffered']
    #allocation10 [shape = 's32[1]{0}', space=sflag, size = 0x4, scoped, tag = 'scoped memory for tpu_custom_call.1']
    #allocation11 [shape = 'u8[8192]{0}', space=vmem, size = 0x2000, scoped, tag = 'input window, operand 6, single buffered']
    #allocation12 [shape = 'u8[512]{0}', space=vmem, size = 0x400, scoped, tag = 'input window, operand 7, single buffered']
    #allocation13 [shape = 's32[1]{0}', space=sflag, size = 0x4, scoped, tag = 'scoped memory for tpu_custom_call.1']
    #allocation14 [shape = 'u8[8192]{0}', space=vmem, size = 0x2000, scoped, tag = 'input window, operand 8, single buffered']
    #allocation15 [shape = 'u8[512]{0}', space=vmem, size = 0x400, scoped, tag = 'input window, operand 9, single buffered']
    #allocation16 [shape = 's32[1]{0}', space=sflag, size = 0x4, scoped, tag = 'scoped memory for tpu_custom_call.1']
    #allocation17 [shape = 'u8[512]{0}', space=vmem, size = 0x400, scoped, tag = 'input window, operand 11, single buffered']
    #allocation18 [shape = 'u8[512]{0}', space=vmem, size = 0x400, scoped, tag = 'input window, operand 12, single buffered']
    #allocation19 [shape = 's32[1]{0}', space=sflag, size = 0x4, scoped, tag = 'scoped memory for tpu_custom_call.1']
    #allocation20 [shape = 'u8[512]{0}', space=vmem, size = 0x400, scoped, tag = 'input window, operand 13, single buffered']
    #allocation21 [shape = 'u8[8192]{0}', space=vmem, size = 0x2000, scoped, tag = 'output window, operand 0']
    %23 = vsyncpa [#allocation7], 0
    %24 = vsyncpa [#allocation10], 0
    %25 = vsyncpa [#allocation13], 0
    %26 = vsyncpa [#allocation16], 0
    %27 = vsyncpa [#allocation19], 0
    %28 = vsyncpa [#allocation8], 0
    %s29 = scalar_lea.sflag [#allocation8], 1
    %30 = vsyncpa %s29, 0
    loop: start=0, step=1, limit=10
    $region2: #{tpu_custom_call.1} parent=1 // loop_pre_header
      _
    $region3: #{tpu_custom_call.1} parent=1 // loop_header
      %s32 = sphi 0, %s36
      %p33 = scmp.ge.s32.totalorder %s32, 10
      %s39 = sphi 0, %s58
      %s40 = sphi 0, %s54
      %s41 = sphi 0, %s50
      %s42 = sphi 0, %s39
      %s43 = sphi 0, %s40
      %s44 = sphi 0, %s41
      %s45 = sphi 0, %s42
      %s46 = sphi 0, %s43
      %s47 = sphi 0, %s44
      %s63 = sphi 0, %s65
      %s66 = sphi 0, %s63
      %s67 = sphi 0, %s66
      %s83 = sphi 0, %s67
      %s91 = sphi 0, %s93
      %s94 = sphi 0, %s91
      %s95 = sphi 0, %s94
      %s111 = sphi 0, %s95
      %s115 = sphi 0, %s115
      %s117 = sphi 0, %s115
      %s118 = sphi 0, %s117
      %s132 = sphi 0, %s118
      %s136 = sphi 0, %s136
      %s138 = sphi 0, %s136
      %s139 = sphi 0, %s138
      %s153 = sphi 0, %s139
      %s157 = sphi 0, %s157
      %s159 = sphi 0, %s157
      %s160 = sphi 0, %s159
      %s174 = sphi 0, %s160
      %s178 = sphi 0, %s178
      %s180 = sphi 0, %s178
      %s181 = sphi 0, %s180
      %s195 = sphi 0, %s181
      %s199 = sphi 0, %s199
      %s201 = sphi 0, %s199
      %s202 = sphi 0, %s201
      %s216 = sphi 0, %s202
      %s220 = sphi 0, %s220
      %s222 = sphi 0, %s220
      %s223 = sphi 0, %s222
      %s237 = sphi 0, %s223
      %s241 = sphi 0, %s241
      %s243 = sphi 0, %s241
      %s244 = sphi 0, %s243
      %s258 = sphi 0, %s244
      %s262 = sphi 0, %s262
      %s264 = sphi 0, %s262
      %s265 = sphi 0, %s264
      %s279 = sphi 0, %s265
      %s283 = sphi 0, %s283
      %s285 = sphi 0, %s283
      %s286 = sphi 0, %s285
      %s300 = sphi 0, %s286
      %s304 = sphi 0, %s304
      %s306 = sphi 0, %s304
      %s307 = sphi 0, %s306
      %s321 = sphi 0, %s307
      %s325 = sphi 0, %s325
      %s327 = sphi 0, %s325
      %s328 = sphi 0, %s327
      %s342 = sphi 0, %s328
      %s346 = sphi 0, %s346
      %s348 = sphi 0, %s346
      %s349 = sphi 0, %s348
      %s363 = sphi 0, %s349
      %s367 = sphi 0, %s367
      %s369 = sphi 0, %s367
      %s370 = sphi 0, %s369
      %s384 = sphi 0, %s370
      %s388 = sphi 0, %s388
      %s390 = sphi 0, %s388
      %s391 = sphi 0, %s390
      %s405 = sphi 0, %s391
      %s409 = sphi 0, %s409
      %s411 = sphi 0, %s409
      %s412 = sphi 0, %s411
      %s426 = sphi 0, %s412
      %s430 = sphi 0, %s430
      %s432 = sphi 0, %s430
      %s433 = sphi 0, %s432
      %s447 = sphi 0, %s433
      %s455 = sphi 0, %s457
      %s458 = sphi 0, %s455
      %s459 = sphi 0, %s458
      %s475 = sphi 0, %s459
    $region4: #{tpu_custom_call.1} parent=1 // loop_header_branch
      %35 = sbr.rel (%p33) target = $region8
    $region5: #{tpu_custom_call.1} parent=1 // loop_body
      %s37 = ssub.s32 %s32, 1
      %s38 = ssub.s32 %s32, 2
      %s48 = sadd.s32 1, %s41
      %p49 = scmp.ge.s32.totalorder %s48, 2
      %s50 = scalar_select %p49, 0, %s48
      %s51 = sadd.s32 1, %s40
      %s52 = scalar_select %p49, %s51, %s40
      %p53 = scmp.ge.s32.totalorder %s52, 2
      %s54 = scalar_select %p53, 0, %s52
      %s55 = sadd.s32 1, %s39
      %s56 = scalar_select %p53, %s55, %s39
      %p57 = scmp.ge.s32.totalorder %s56, 2
      %s58 = scalar_select %p57, 0, %s56
      %s59 = ssub.s32 %s39, %s58
      %s60 = ssub.s32 %s40, %s54
      %s61 = sor.u32 %s59, %s60
      %p62 = scmp.eq.s32.totalorder %s61, 0
      %s64 = sadd.s32 %s63, 1
      %s65 = scalar_select %p62, %s63, %s64
      %p68 = pneg %p62
      %p69 = scmp.eq.s32.totalorder %s32, 7
      %p70 = por %p68, %p69
      %p71 = scmp.ne.s32.totalorder %s63, %s66
      %p72 = scmp.eq.s32.totalorder %s32, 0
      %p73 = por %p71, %p72
      %p74 = scmp.ne.s32.totalorder %s63, %s66
      %p75 = scmp.eq.s32.totalorder %s37, 7
      %p76 = por %p74, %p75
      %p77 = scmp.ne.s32.totalorder %s66, %s67
      %p78 = scmp.eq.s32.totalorder %s37, 0
      %p79 = por %p77, %p78
      %p80 = scmp.ne.s32.totalorder %s66, %s67
      %p81 = scmp.eq.s32.totalorder %s38, 7
      %p82 = por %p80, %p81
      %p84 = scmp.ne.s32.totalorder %s67, %s83
      %p85 = scmp.eq.s32.totalorder %s38, 0
      %p86 = por %p84, %p85
      %s87 = ssub.s32 %s39, %s58
      %s88 = ssub.s32 %s41, %s50
      %s89 = sor.u32 %s87, %s88
      %p90 = scmp.eq.s32.totalorder %s89, 0
      %s92 = sadd.s32 %s91, 1
      %s93 = scalar_select %p90, %s91, %s92
      %p96 = pneg %p90
      %p97 = scmp.eq.s32.totalorder %s32, 7
      %p98 = por %p96, %p97
      %p99 = scmp.ne.s32.totalorder %s91, %s94
      %p100 = scmp.eq.s32.totalorder %s32, 0
      %p101 = por %p99, %p100
      %p102 = scmp.ne.s32.totalorder %s91, %s94
      %p103 = scmp.eq.s32.totalorder %s37, 7
      %p104 = por %p102, %p103
      %p105 = scmp.ne.s32.totalorder %s94, %s95
      %p106 = scmp.eq.s32.totalorder %s37, 0
      %p107 = por %p105, %p106
      %p108 = scmp.ne.s32.totalorder %s94, %s95
      %p109 = scmp.eq.s32.totalorder %s38, 7
      %p110 = por %p108, %p109
      %p112 = scmp.ne.s32.totalorder %s95, %s111
      %p113 = scmp.eq.s32.totalorder %s38, 0
      %p114 = por %p112, %p113
      %s116 = sadd.s32 %s115, 1
      %p119 = scmp.eq.s32.totalorder %s32, 7
      %p120 = scmp.ne.s32.totalorder %s115, %s117
      %p121 = scmp.eq.s32.totalorder %s32, 0
      %p122 = por %p120, %p121
      %p123 = scmp.ne.s32.totalorder %s115, %s117
      %p124 = scmp.eq.s32.totalorder %s37, 7
      %p125 = por %p123, %p124
      %p126 = scmp.ne.s32.totalorder %s117, %s118
      %p127 = scmp.eq.s32.totalorder %s37, 0
      %p128 = por %p126, %p127
      %p129 = scmp.ne.s32.totalorder %s117, %s118
      %p130 = scmp.eq.s32.totalorder %s38, 7
      %p131 = por %p129, %p130
      %p133 = scmp.ne.s32.totalorder %s118, %s132
      %p134 = scmp.eq.s32.totalorder %s38, 0
      %p135 = por %p133, %p134
      %s137 = sadd.s32 %s136, 1
      %p140 = scmp.eq.s32.totalorder %s32, 7
      %p141 = scmp.ne.s32.totalorder %s136, %s138
      %p142 = scmp.eq.s32.totalorder %s32, 0
      %p143 = por %p141, %p142
      %p144 = scmp.ne.s32.totalorder %s136, %s138
      %p145 = scmp.eq.s32.totalorder %s37, 7
      %p146 = por %p144, %p145
      %p147 = scmp.ne.s32.totalorder %s138, %s139
      %p148 = scmp.eq.s32.totalorder %s37, 0
      %p149 = por %p147, %p148
      %p150 = scmp.ne.s32.totalorder %s138, %s139
      %p151 = scmp.eq.s32.totalorder %s38, 7
      %p152 = por %p150, %p151
      %p154 = scmp.ne.s32.totalorder %s139, %s153
      %p155 = scmp.eq.s32.totalorder %s38, 0
      %p156 = por %p154, %p155
      %s158 = sadd.s32 %s157, 1
      %p161 = scmp.eq.s32.totalorder %s32, 7
      %p162 = scmp.ne.s32.totalorder %s157, %s159
      %p163 = scmp.eq.s32.totalorder %s32, 0
      %p164 = por %p162, %p163
      %p165 = scmp.ne.s32.totalorder %s157, %s159
      %p166 = scmp.eq.s32.totalorder %s37, 7
      %p167 = por %p165, %p166
      %p168 = scmp.ne.s32.totalorder %s159, %s160
      %p169 = scmp.eq.s32.totalorder %s37, 0
      %p170 = por %p168, %p169
      %p171 = scmp.ne.s32.totalorder %s159, %s160
      %p172 = scmp.eq.s32.totalorder %s38, 7
      %p173 = por %p171, %p172
      %p175 = scmp.ne.s32.totalorder %s160, %s174
      %p176 = scmp.eq.s32.totalorder %s38, 0
      %p177 = por %p175, %p176
      %s179 = sadd.s32 %s178, 1
      %p182 = scmp.eq.s32.totalorder %s32, 7
      %p183 = scmp.ne.s32.totalorder %s178, %s180
      %p184 = scmp.eq.s32.totalorder %s32, 0
      %p185 = por %p183, %p184
      %p186 = scmp.ne.s32.totalorder %s178, %s180
      %p187 = scmp.eq.s32.totalorder %s37, 7
      %p188 = por %p186, %p187
      %p189 = scmp.ne.s32.totalorder %s180, %s181
      %p190 = scmp.eq.s32.totalorder %s37, 0
      %p191 = por %p189, %p190
      %p192 = scmp.ne.s32.totalorder %s180, %s181
      %p193 = scmp.eq.s32.totalorder %s38, 7
      %p194 = por %p192, %p193
      %p196 = scmp.ne.s32.totalorder %s181, %s195
      %p197 = scmp.eq.s32.totalorder %s38, 0
      %p198 = por %p196, %p197
      %s200 = sadd.s32 %s199, 1
      %p203 = scmp.eq.s32.totalorder %s32, 7
      %p204 = scmp.ne.s32.totalorder %s199, %s201
      %p205 = scmp.eq.s32.totalorder %s32, 0
      %p206 = por %p204, %p205
      %p207 = scmp.ne.s32.totalorder %s199, %s201
      %p208 = scmp.eq.s32.totalorder %s37, 7
      %p209 = por %p207, %p208
      %p210 = scmp.ne.s32.totalorder %s201, %s202
      %p211 = scmp.eq.s32.totalorder %s37, 0
      %p212 = por %p210, %p211
      %p213 = scmp.ne.s32.totalorder %s201, %s202
      %p214 = scmp.eq.s32.totalorder %s38, 7
      %p215 = por %p213, %p214
      %p217 = scmp.ne.s32.totalorder %s202, %s216
      %p218 = scmp.eq.s32.totalorder %s38, 0
      %p219 = por %p217, %p218
      %s221 = sadd.s32 %s220, 1
      %p224 = scmp.eq.s32.totalorder %s32, 7
      %p225 = scmp.ne.s32.totalorder %s220, %s222
      %p226 = scmp.eq.s32.totalorder %s32, 0
      %p227 = por %p225, %p226
      %p228 = scmp.ne.s32.totalorder %s220, %s222
      %p229 = scmp.eq.s32.totalorder %s37, 7
      %p230 = por %p228, %p229
      %p231 = scmp.ne.s32.totalorder %s222, %s223
      %p232 = scmp.eq.s32.totalorder %s37, 0
      %p233 = por %p231, %p232
      %p234 = scmp.ne.s32.totalorder %s222, %s223
      %p235 = scmp.eq.s32.totalorder %s38, 7
      %p236 = por %p234, %p235
      %p238 = scmp.ne.s32.totalorder %s223, %s237
      %p239 = scmp.eq.s32.totalorder %s38, 0
      %p240 = por %p238, %p239
      %s242 = sadd.s32 %s241, 1
      %p245 = scmp.eq.s32.totalorder %s32, 7
      %p246 = scmp.ne.s32.totalorder %s241, %s243
      %p247 = scmp.eq.s32.totalorder %s32, 0
      %p248 = por %p246, %p247
      %p249 = scmp.ne.s32.totalorder %s241, %s243
      %p250 = scmp.eq.s32.totalorder %s37, 7
      %p251 = por %p249, %p250
      %p252 = scmp.ne.s32.totalorder %s243, %s244
      %p253 = scmp.eq.s32.totalorder %s37, 0
      %p254 = por %p252, %p253
      %p255 = scmp.ne.s32.totalorder %s243, %s244
      %p256 = scmp.eq.s32.totalorder %s38, 7
      %p257 = por %p255, %p256
      %p259 = scmp.ne.s32.totalorder %s244, %s258
      %p260 = scmp.eq.s32.totalorder %s38, 0
      %p261 = por %p259, %p260
      %s263 = sadd.s32 %s262, 1
      %p266 = scmp.eq.s32.totalorder %s32, 7
      %p267 = scmp.ne.s32.totalorder %s262, %s264
      %p268 = scmp.eq.s32.totalorder %s32, 0
      %p269 = por %p267, %p268
      %p270 = scmp.ne.s32.totalorder %s262, %s264
      %p271 = scmp.eq.s32.totalorder %s37, 7
      %p272 = por %p270, %p271
      %p273 = scmp.ne.s32.totalorder %s264, %s265
      %p274 = scmp.eq.s32.totalorder %s37, 0
      %p275 = por %p273, %p274
      %p276 = scmp.ne.s32.totalorder %s264, %s265
      %p277 = scmp.eq.s32.totalorder %s38, 7
      %p278 = por %p276, %p277
      %p280 = scmp.ne.s32.totalorder %s265, %s279
      %p281 = scmp.eq.s32.totalorder %s38, 0
      %p282 = por %p280, %p281
      %s284 = sadd.s32 %s283, 1
      %p287 = scmp.eq.s32.totalorder %s32, 7
      %p288 = scmp.ne.s32.totalorder %s283, %s285
      %p289 = scmp.eq.s32.totalorder %s32, 0
      %p290 = por %p288, %p289
      %p291 = scmp.ne.s32.totalorder %s283, %s285
      %p292 = scmp.eq.s32.totalorder %s37, 7
      %p293 = por %p291, %p292
      %p294 = scmp.ne.s32.totalorder %s285, %s286
      %p295 = scmp.eq.s32.totalorder %s37, 0
      %p296 = por %p294, %p295
      %p297 = scmp.ne.s32.totalorder %s285, %s286
      %p298 = scmp.eq.s32.totalorder %s38, 7
      %p299 = por %p297, %p298
      %p301 = scmp.ne.s32.totalorder %s286, %s300
      %p302 = scmp.eq.s32.totalorder %s38, 0
      %p303 = por %p301, %p302
      %s305 = sadd.s32 %s304, 1
      %p308 = scmp.eq.s32.totalorder %s32, 7
      %p309 = scmp.ne.s32.totalorder %s304, %s306
      %p310 = scmp.eq.s32.totalorder %s32, 0
      %p311 = por %p309, %p310
      %p312 = scmp.ne.s32.totalorder %s304, %s306
      %p313 = scmp.eq.s32.totalorder %s37, 7
      %p314 = por %p312, %p313
      %p315 = scmp.ne.s32.totalorder %s306, %s307
      %p316 = scmp.eq.s32.totalorder %s37, 0
      %p317 = por %p315, %p316
      %p318 = scmp.ne.s32.totalorder %s306, %s307
      %p319 = scmp.eq.s32.totalorder %s38, 7
      %p320 = por %p318, %p319
      %p322 = scmp.ne.s32.totalorder %s307, %s321
      %p323 = scmp.eq.s32.totalorder %s38, 0
      %p324 = por %p322, %p323
      %s326 = sadd.s32 %s325, 1
      %p329 = scmp.eq.s32.totalorder %s32, 7
      %p330 = scmp.ne.s32.totalorder %s325, %s327
      %p331 = scmp.eq.s32.totalorder %s32, 0
      %p332 = por %p330, %p331
      %p333 = scmp.ne.s32.totalorder %s325, %s327
      %p334 = scmp.eq.s32.totalorder %s37, 7
      %p335 = por %p333, %p334
      %p336 = scmp.ne.s32.totalorder %s327, %s328
      %p337 = scmp.eq.s32.totalorder %s37, 0
      %p338 = por %p336, %p337
      %p339 = scmp.ne.s32.totalorder %s327, %s328
      %p340 = scmp.eq.s32.totalorder %s38, 7
      %p341 = por %p339, %p340
      %p343 = scmp.ne.s32.totalorder %s328, %s342
      %p344 = scmp.eq.s32.totalorder %s38, 0
      %p345 = por %p343, %p344
      %s347 = sadd.s32 %s346, 1
      %p350 = scmp.eq.s32.totalorder %s32, 7
      %p351 = scmp.ne.s32.totalorder %s346, %s348
      %p352 = scmp.eq.s32.totalorder %s32, 0
      %p353 = por %p351, %p352
      %p354 = scmp.ne.s32.totalorder %s346, %s348
      %p355 = scmp.eq.s32.totalorder %s37, 7
      %p356 = por %p354, %p355
      %p357 = scmp.ne.s32.totalorder %s348, %s349
      %p358 = scmp.eq.s32.totalorder %s37, 0
      %p359 = por %p357, %p358
      %p360 = scmp.ne.s32.totalorder %s348, %s349
      %p361 = scmp.eq.s32.totalorder %s38, 7
      %p362 = por %p360, %p361
      %p364 = scmp.ne.s32.totalorder %s349, %s363
      %p365 = scmp.eq.s32.totalorder %s38, 0
      %p366 = por %p364, %p365
      %s368 = sadd.s32 %s367, 1
      %p371 = scmp.eq.s32.totalorder %s32, 7
      %p372 = scmp.ne.s32.totalorder %s367, %s369
      %p373 = scmp.eq.s32.totalorder %s32, 0
      %p374 = por %p372, %p373
      %p375 = scmp.ne.s32.totalorder %s367, %s369
      %p376 = scmp.eq.s32.totalorder %s37, 7
      %p377 = por %p375, %p376
      %p378 = scmp.ne.s32.totalorder %s369, %s370
      %p379 = scmp.eq.s32.totalorder %s37, 0
      %p380 = por %p378, %p379
      %p381 = scmp.ne.s32.totalorder %s369, %s370
      %p382 = scmp.eq.s32.totalorder %s38, 7
      %p383 = por %p381, %p382
      %p385 = scmp.ne.s32.totalorder %s370, %s384
      %p386 = scmp.eq.s32.totalorder %s38, 0
      %p387 = por %p385, %p386
      %s389 = sadd.s32 %s388, 1
      %p392 = scmp.eq.s32.totalorder %s32, 7
      %p393 = scmp.ne.s32.totalorder %s388, %s390
      %p394 = scmp.eq.s32.totalorder %s32, 0
      %p395 = por %p393, %p394
      %p396 = scmp.ne.s32.totalorder %s388, %s390
      %p397 = scmp.eq.s32.totalorder %s37, 7
      %p398 = por %p396, %p397
      %p399 = scmp.ne.s32.totalorder %s390, %s391
      %p400 = scmp.eq.s32.totalorder %s37, 0
      %p401 = por %p399, %p400
      %p402 = scmp.ne.s32.totalorder %s390, %s391
      %p403 = scmp.eq.s32.totalorder %s38, 7
      %p404 = por %p402, %p403
      %p406 = scmp.ne.s32.totalorder %s391, %s405
      %p407 = scmp.eq.s32.totalorder %s38, 0
      %p408 = por %p406, %p407
      %s410 = sadd.s32 %s409, 1
      %p413 = scmp.eq.s32.totalorder %s32, 7
      %p414 = scmp.ne.s32.totalorder %s409, %s411
      %p415 = scmp.eq.s32.totalorder %s32, 0
      %p416 = por %p414, %p415
      %p417 = scmp.ne.s32.totalorder %s409, %s411
      %p418 = scmp.eq.s32.totalorder %s37, 7
      %p419 = por %p417, %p418
      %p420 = scmp.ne.s32.totalorder %s411, %s412
      %p421 = scmp.eq.s32.totalorder %s37, 0
      %p422 = por %p420, %p421
      %p423 = scmp.ne.s32.totalorder %s411, %s412
      %p424 = scmp.eq.s32.totalorder %s38, 7
      %p425 = por %p423, %p424
      %p427 = scmp.ne.s32.totalorder %s412, %s426
      %p428 = scmp.eq.s32.totalorder %s38, 0
      %p429 = por %p427, %p428
      %s431 = sadd.s32 %s430, 1
      %p434 = scmp.eq.s32.totalorder %s32, 7
      %p435 = scmp.ne.s32.totalorder %s430, %s432
      %p436 = scmp.eq.s32.totalorder %s32, 0
      %p437 = por %p435, %p436
      %p438 = scmp.ne.s32.totalorder %s430, %s432
      %p439 = scmp.eq.s32.totalorder %s37, 7
      %p440 = por %p438, %p439
      %p441 = scmp.ne.s32.totalorder %s432, %s433
      %p442 = scmp.eq.s32.totalorder %s37, 0
      %p443 = por %p441, %p442
      %p444 = scmp.ne.s32.totalorder %s432, %s433
      %p445 = scmp.eq.s32.totalorder %s38, 7
      %p446 = por %p444, %p445
      %p448 = scmp.ne.s32.totalorder %s433, %s447
      %p449 = scmp.eq.s32.totalorder %s38, 0
      %p450 = por %p448, %p449
      %s451 = ssub.s32 %s39, %s58
      %s452 = ssub.s32 %s40, %s54
      %s453 = sor.u32 %s451, %s452
      %p454 = scmp.eq.s32.totalorder %s453, 0
      %s456 = sadd.s32 %s455, 1
      %s457 = scalar_select %p454, %s455, %s456
      %p460 = pneg %p454
      %p461 = scmp.eq.s32.totalorder %s32, 7
      %p462 = por %p460, %p461
      %p463 = scmp.ne.s32.totalorder %s455, %s458
      %p464 = scmp.eq.s32.totalorder %s32, 0
      %p465 = por %p463, %p464
      %p466 = scmp.ne.s32.totalorder %s455, %s458
      %p467 = scmp.eq.s32.totalorder %s37, 7
      %p468 = por %p466, %p467
      %p469 = scmp.ne.s32.totalorder %s458, %s459
      %p470 = scmp.eq.s32.totalorder %s37, 0
      %p471 = por %p469, %p470
      %p472 = scmp.ne.s32.totalorder %s458, %s459
      %p473 = scmp.eq.s32.totalorder %s38, 7
      %p474 = por %p472, %p473
      %p476 = scmp.ne.s32.totalorder %s459, %s475
      %p477 = scmp.eq.s32.totalorder %s38, 0
      %p478 = por %p476, %p477
      %p479 = scmp.le.s32.totalorder 1, %s32
      %p480 = scmp.lt.s32.totalorder %s32, 9
      %p481 = pnand %p479, %p480
      %p482 = pneg %p481
      // Predicated region
      $region9: #{tpu_custom_call.1} parent=5 // pred_check
        _
      $region10: #{tpu_custom_call.1} parent=5 // pred_check_branch
        %484 = sbr.rel (%p481) target = $region12
      $region11: #{tpu_custom_call.1} parent=5 // pred_region
        %s485 = ssub.s32 %s32, 1
        // Predicated region
        $region13: #{tpu_custom_call.1} parent=11 // pred_check
          %p486 = pneg %p128
        $region14: #{tpu_custom_call.1} parent=11 // pred_check_branch
          %488 = sbr.rel (%p486) target = $region16
        $region15: #{tpu_custom_call.1} parent=11 // pred_region
          _
        $region16: #{tpu_custom_call.1} parent=11 // pred_fallthru
          _
        // Predicated region
        $region17: #{tpu_custom_call.1} parent=11 // pred_check
          %p489 = pneg %p149
        $region18: #{tpu_custom_call.1} parent=11 // pred_check_branch
          %491 = sbr.rel (%p489) target = $region20
        $region19: #{tpu_custom_call.1} parent=11 // pred_region
          %s493 = ssub.s32 16, 16
          %494 = vsyncadd [#allocation7], %s493
          %s496 = sshll.u32 [#allocation6], 4
          %s497 = int_to_ptr.vmem [resolvable:$true] %s496
          %499 = dma.hbm_to_vmem [thread:$0]  %s3, 16, %s497, [#allocation7]
        $region20: #{tpu_custom_call.1} parent=11 // pred_fallthru
          _
        // Predicated region
        $region21: #{tpu_custom_call.1} parent=11 // pred_check
          %p500 = pneg %p170
        $region22: #{tpu_custom_call.1} parent=11 // pred_check_branch
          %502 = sbr.rel (%p500) target = $region24
        $region23: #{tpu_custom_call.1} parent=11 // pred_region
          _
        $region24: #{tpu_custom_call.1} parent=11 // pred_fallthru
          _
        // Predicated region
        $region25: #{tpu_custom_call.1} parent=11 // pred_check
          %p503 = pneg %p191
        $region26: #{tpu_custom_call.1} parent=11 // pred_check_branch
          %505 = sbr.rel (%p503) target = $region28
        $region27: #{tpu_custom_call.1} parent=11 // pred_region
          %s507 = ssub.s32 16, 16
          %508 = vsyncadd [#allocation10], %s507
          %s510 = sshll.u32 [#allocation9], 4
          %s511 = int_to_ptr.vmem [resolvable:$true] %s510
          %513 = dma.hbm_to_vmem [thread:$0]  %s5, 16, %s511, [#allocation10]
        $region28: #{tpu_custom_call.1} parent=11 // pred_fallthru
          _
        // Predicated region
        $region29: #{tpu_custom_call.1} parent=11 // pred_check
          %p514 = pneg %p212
        $region30: #{tpu_custom_call.1} parent=11 // pred_check_branch
          %516 = sbr.rel (%p514) target = $region32
        $region31: #{tpu_custom_call.1} parent=11 // pred_region
          %s518 = ssub.s32 256, 256
          %519 = vsyncadd [#allocation10], %s518
          %s520 = sshll.u32 [#allocation11], 4
          %s521 = int_to_ptr.vmem [resolvable:$true] %s520
          %526 = dma.hbm_to_vmem [thread:$0]  %s6, 256, %s521, [#allocation10], 64, 64, 4
        $region32: #{tpu_custom_call.1} parent=11 // pred_fallthru
          _
        // Predicated region
        $region33: #{tpu_custom_call.1} parent=11 // pred_check
          %p527 = pneg %p233
        $region34: #{tpu_custom_call.1} parent=11 // pred_check_branch
          %529 = sbr.rel (%p527) target = $region36
        $region35: #{tpu_custom_call.1} parent=11 // pred_region
          %s531 = ssub.s32 16, 16
          %532 = vsyncadd [#allocation13], %s531
          %s534 = sshll.u32 [#allocation12], 4
          %s535 = int_to_ptr.vmem [resolvable:$true] %s534
          %537 = dma.hbm_to_vmem [thread:$0]  %s7, 16, %s535, [#allocation13]
        $region36: #{tpu_custom_call.1} parent=11 // pred_fallthru
          _
        // Predicated region
        $region37: #{tpu_custom_call.1} parent=11 // pred_check
          %p538 = pneg %p254
        $region38: #{tpu_custom_call.1} parent=11 // pred_check_branch
          %540 = sbr.rel (%p538) target = $region40
        $region39: #{tpu_custom_call.1} parent=11 // pred_region
          %s542 = ssub.s32 256, 256
          %543 = vsyncadd [#allocation13], %s542
          %s544 = sshll.u32 [#allocation14], 4
          %s545 = int_to_ptr.vmem [resolvable:$true] %s544
          %550 = dma.hbm_to_vmem [thread:$0]  %s8, 256, %s545, [#allocation13], 64, 64, 4
        $region40: #{tpu_custom_call.1} parent=11 // pred_fallthru
          _
        // Predicated region
        $region41: #{tpu_custom_call.1} parent=11 // pred_check
          %p551 = pneg %p275
        $region42: #{tpu_custom_call.1} parent=11 // pred_check_branch
          %553 = sbr.rel (%p551) target = $region44
        $region43: #{tpu_custom_call.1} parent=11 // pred_region
          %s555 = ssub.s32 16, 16
          %556 = vsyncadd [#allocation16], %s555
          %s558 = sshll.u32 [#allocation15], 4
          %s559 = int_to_ptr.vmem [resolvable:$true] %s558
          %561 = dma.hbm_to_vmem [thread:$0]  %s9, 16, %s559, [#allocation16]
        $region44: #{tpu_custom_call.1} parent=11 // pred_fallthru
          _
        // Predicated region
        $region45: #{tpu_custom_call.1} parent=11 // pred_check
          %p562 = pneg %p296
        $region46: #{tpu_custom_call.1} parent=11 // pred_check_branch
          %564 = sbr.rel (%p562) target = $region48
        $region47: #{tpu_custom_call.1} parent=11 // pred_region
          _
        $region48: #{tpu_custom_call.1} parent=11 // pred_fallthru
          _
        // Predicated region
        $region49: #{tpu_custom_call.1} parent=11 // pred_check
          %p565 = pneg %p317
        $region50: #{tpu_custom_call.1} parent=11 // pred_check_branch
          %567 = sbr.rel (%p565) target = $region52
        $region51: #{tpu_custom_call.1} parent=11 // pred_region
          %s569 = ssub.s32 16, 16
          %570 = vsyncadd [#allocation16], %s569
          %s572 = sshll.u32 [#allocation17], 4
          %s573 = int_to_ptr.vmem [resolvable:$true] %s572
          %575 = dma.hbm_to_vmem [thread:$0]  %s11, 16, %s573, [#allocation16]
        $region52: #{tpu_custom_call.1} parent=11 // pred_fallthru
          _
        // Predicated region
        $region53: #{tpu_custom_call.1} parent=11 // pred_check
          %p576 = pneg %p338
        $region54: #{tpu_custom_call.1} parent=11 // pred_check_branch
          %578 = sbr.rel (%p576) target = $region56
        $region55: #{tpu_custom_call.1} parent=11 // pred_region
          %s580 = ssub.s32 16, 16
          %581 = vsyncadd [#allocation19], %s580
          %s583 = sshll.u32 [#allocation18], 4
          %s584 = int_to_ptr.vmem [resolvable:$true] %s583
          %586 = dma.hbm_to_vmem [thread:$0]  %s12, 16, %s584, [#allocation19]
        $region56: #{tpu_custom_call.1} parent=11 // pred_fallthru
          _
        // Predicated region
        $region57: #{tpu_custom_call.1} parent=11 // pred_check
          %p587 = pneg %p359
        $region58: #{tpu_custom_call.1} parent=11 // pred_check_branch
          %589 = sbr.rel (%p587) target = $region60
        $region59: #{tpu_custom_call.1} parent=11 // pred_region
          %s591 = ssub.s32 16, 16
          %592 = vsyncadd [#allocation19], %s591
          %s594 = sshll.u32 [#allocation20], 4
          %s595 = int_to_ptr.vmem [resolvable:$true] %s594
          %597 = dma.hbm_to_vmem [thread:$0]  %s13, 16, %s595, [#allocation19]
        $region60: #{tpu_custom_call.1} parent=11 // pred_fallthru
          _
        // Predicated region
        $region61: #{tpu_custom_call.1} parent=11 // pred_check
          %p598 = pneg %p380
        $region62: #{tpu_custom_call.1} parent=11 // pred_check_branch
          %600 = sbr.rel (%p598) target = $region64
        $region63: #{tpu_custom_call.1} parent=11 // pred_region
          _
        $region64: #{tpu_custom_call.1} parent=11 // pred_fallthru
          _
        // Predicated region
        $region65: #{tpu_custom_call.1} parent=11 // pred_check
          %p601 = pneg %p401
        $region66: #{tpu_custom_call.1} parent=11 // pred_check_branch
          %603 = sbr.rel (%p601) target = $region68
        $region67: #{tpu_custom_call.1} parent=11 // pred_region
          _
        $region68: #{tpu_custom_call.1} parent=11 // pred_fallthru
          _
        // Predicated region
        $region69: #{tpu_custom_call.1} parent=11 // pred_check
          %p604 = pneg %p422
        $region70: #{tpu_custom_call.1} parent=11 // pred_check_branch
          %606 = sbr.rel (%p604) target = $region72
        $region71: #{tpu_custom_call.1} parent=11 // pred_region
          _
        $region72: #{tpu_custom_call.1} parent=11 // pred_fallthru
          _
        // Predicated region
        $region73: #{tpu_custom_call.1} parent=11 // pred_check
          %p607 = pneg %p443
        $region74: #{tpu_custom_call.1} parent=11 // pred_check_branch
          %609 = sbr.rel (%p607) target = $region76
        $region75: #{tpu_custom_call.1} parent=11 // pred_region
          _
        $region76: #{tpu_custom_call.1} parent=11 // pred_fallthru
          _
      $region12: #{tpu_custom_call.1} parent=5 // pred_fallthru
        _
      %p610 = scmp.lt.s32.totalorder %s32, 8
      // Predicated region
      $region77: #{tpu_custom_call.1} parent=5 // pred_check
        %p611 = pneg %p610
      $region78: #{tpu_custom_call.1} parent=5 // pred_check_branch
        %613 = sbr.rel (%p611) target = $region80
      $region79: #{tpu_custom_call.1} parent=5 // pred_region
        // Predicated region
        $region81: #{tpu_custom_call.1} parent=79 // pred_check
          %p614 = pneg %p73
        $region82: #{tpu_custom_call.1} parent=79 // pred_check_branch
          %616 = sbr.rel (%p614) target = $region84
        $region83: #{tpu_custom_call.1} parent=79 // pred_region
          %p617 = scmp.lt.s32.totalorder %s39, 1
          %s618 = scalar_select %p617, %s39, 1
          %p619 = scmp.lt.s32.totalorder %s40, 1
          %s620 = scalar_select %p619, %s40, 1
          %s621 = smul.addr %s618, 2
          %s622 = sadd.s32 %s620, %s621
          %s623 = smul.addr %s622, 8
          %s624 = scalar_lea.vmem %s0, %s623
        $region84: #{tpu_custom_call.1} parent=79 // pred_fallthru
          _
        // Predicated region
        $region85: #{tpu_custom_call.1} parent=79 // pred_check
          %p625 = pneg %p101
        $region86: #{tpu_custom_call.1} parent=79 // pred_check_branch
          %627 = sbr.rel (%p625) target = $region88
        $region87: #{tpu_custom_call.1} parent=79 // pred_region
          %p628 = scmp.lt.s32.totalorder %s39, 1
          %s629 = scalar_select %p628, %s39, 1
          %p630 = scmp.lt.s32.totalorder %s41, 1
          %s631 = scalar_select %p630, %s41, 1
          %s632 = smul.addr %s629, 2
          %s633 = sadd.s32 %s631, %s632
          %s634 = smul.addr %s633, 8
          %s635 = scalar_lea.vmem %s1, %s634
        $region88: #{tpu_custom_call.1} parent=79 // pred_fallthru
          _
      $region80: #{tpu_custom_call.1} parent=5 // pred_fallthru
        _
      %p636 = scmp.le.s32.totalorder 1, %s32
      %p637 = scmp.lt.s32.totalorder %s32, 9
      %p638 = pnand %p636, %p637
      %p639 = pneg %p638
      // Predicated region
      $region89: #{tpu_custom_call.1} parent=5 // pred_check
        _
      $region90: #{tpu_custom_call.1} parent=5 // pred_check_branch
        %641 = sbr.rel (%p638) target = $region92
      $region91: #{tpu_custom_call.1} parent=5 // pred_region
        %s642 = ssub.s32 %s32, 1
        // Predicated region
        $region93: #{tpu_custom_call.1} parent=91 // pred_check
          %p643 = pneg %p149
        $region94: #{tpu_custom_call.1} parent=91 // pred_check_branch
          %645 = sbr.rel (%p643) target = $region96
        $region95: #{tpu_custom_call.1} parent=91 // pred_region
          %646 = dma.done [#allocation7], 16
        $region96: #{tpu_custom_call.1} parent=91 // pred_fallthru
          _
        // Predicated region
        $region97: #{tpu_custom_call.1} parent=91 // pred_check
          %p647 = pneg %p191
        $region98: #{tpu_custom_call.1} parent=91 // pred_check_branch
          %649 = sbr.rel (%p647) target = $region100
        $region99: #{tpu_custom_call.1} parent=91 // pred_region
          %650 = dma.done [#allocation10], 16
        $region100: #{tpu_custom_call.1} parent=91 // pred_fallthru
          _
        // Predicated region
        $region101: #{tpu_custom_call.1} parent=91 // pred_check
          %p651 = pneg %p212
        $region102: #{tpu_custom_call.1} parent=91 // pred_check_branch
          %653 = sbr.rel (%p651) target = $region104
        $region103: #{tpu_custom_call.1} parent=91 // pred_region
          %654 = dma.done [#allocation10], 256
        $region104: #{tpu_custom_call.1} parent=91 // pred_fallthru
          _
        // Predicated region
        $region105: #{tpu_custom_call.1} parent=91 // pred_check
          %p655 = pneg %p233
        $region106: #{tpu_custom_call.1} parent=91 // pred_check_branch
          %657 = sbr.rel (%p655) target = $region108
        $region107: #{tpu_custom_call.1} parent=91 // pred_region
          %658 = dma.done [#allocation13], 16
        $region108: #{tpu_custom_call.1} parent=91 // pred_fallthru
          _
        // Predicated region
        $region109: #{tpu_custom_call.1} parent=91 // pred_check
          %p659 = pneg %p254
        $region110: #{tpu_custom_call.1} parent=91 // pred_check_branch
          %661 = sbr.rel (%p659) target = $region112
        $region111: #{tpu_custom_call.1} parent=91 // pred_region
          %662 = dma.done [#allocation13], 256
        $region112: #{tpu_custom_call.1} parent=91 // pred_fallthru
          _
        // Predicated region
        $region113: #{tpu_custom_call.1} parent=91 // pred_check
          %p663 = pneg %p275
        $region114: #{tpu_custom_call.1} parent=91 // pred_check_branch
          %665 = sbr.rel (%p663) target = $region116
        $region115: #{tpu_custom_call.1} parent=91 // pred_region
          %666 = dma.done [#allocation16], 16
        $region116: #{tpu_custom_call.1} parent=91 // pred_fallthru
          _
        // Predicated region
        $region117: #{tpu_custom_call.1} parent=91 // pred_check
          %p667 = pneg %p317
        $region118: #{tpu_custom_call.1} parent=91 // pred_check_branch
          %669 = sbr.rel (%p667) target = $region120
        $region119: #{tpu_custom_call.1} parent=91 // pred_region
          %670 = dma.done [#allocation16], 16
        $region120: #{tpu_custom_call.1} parent=91 // pred_fallthru
          _
        // Predicated region
        $region121: #{tpu_custom_call.1} parent=91 // pred_check
          %p671 = pneg %p338
        $region122: #{tpu_custom_call.1} parent=91 // pred_check_branch
          %673 = sbr.rel (%p671) target = $region124
        $region123: #{tpu_custom_call.1} parent=91 // pred_region
          %674 = dma.done [#allocation19], 16
        $region124: #{tpu_custom_call.1} parent=91 // pred_fallthru
          _
        // Predicated region
        $region125: #{tpu_custom_call.1} parent=91 // pred_check
          %p675 = pneg %p359
        $region126: #{tpu_custom_call.1} parent=91 // pred_check_branch
          %677 = sbr.rel (%p675) target = $region128
        $region127: #{tpu_custom_call.1} parent=91 // pred_region
          %678 = dma.done [#allocation19], 16
        $region128: #{tpu_custom_call.1} parent=91 // pred_fallthru
          _
        %p679 = scmp.lt.s32.totalorder %s42, 1
        %s680 = scalar_select %p679, %s42, 1
        %p681 = scmp.lt.s32.totalorder %s43, 1
        %s682 = scalar_select %p681, %s43, 1
        %s683 = smul.addr %s680, 2
        %s684 = sadd.s32 %s682, %s683
        %s685 = smul.addr %s684, 8
        %s686 = scalar_lea.vmem %s0, %s685
        %p687 = pneg %p79
        %p688 = pneg %p76
        %p689 = scmp.lt.s32.totalorder %s42, 1
        %s690 = scalar_select %p689, %s42, 1
        %p691 = scmp.lt.s32.totalorder %s44, 1
        %s692 = scalar_select %p691, %s44, 1
        %s693 = smul.addr %s690, 2
        %s694 = sadd.s32 %s692, %s693
        %s695 = smul.addr %s694, 8
        %s696 = scalar_lea.vmem %s1, %s695
        %p697 = pneg %p107
        %p698 = pneg %p104
        %p699 = pneg %p128
        %p700 = pneg %p125
        %p701 = pneg %p149
        %p702 = pneg %p146
        %p703 = pneg %p170
        %p704 = pneg %p167
        %p705 = pneg %p191
        %p706 = pneg %p188
        %p707 = pneg %p212
        %p708 = pneg %p209
        %p709 = pneg %p233
        %p710 = pneg %p230
        %p711 = pneg %p254
        %p712 = pneg %p251
        %p713 = pneg %p275
        %p714 = pneg %p272
        %p715 = pneg %p296
        %p716 = pneg %p293
        %p717 = pneg %p317
        %p718 = pneg %p314
        %p719 = pneg %p338
        %p720 = pneg %p335
        %p721 = pneg %p359
        %p722 = pneg %p356
        %p723 = pneg %p380
        %p724 = pneg %p377
        %p725 = pneg %p401
        %p726 = pneg %p398
        %p727 = pneg %p422
        %p728 = pneg %p419
        %p729 = pneg %p443
        %p730 = pneg %p440
        %p731 = pneg %p471
        %p732 = pneg %p468
        %s733 = sand.u32 %s458, 1
        %s734 = scalar_lea.sflag [#allocation8], %s733
        %s735 = sand.u32 %s458, 1
        %s736 = smul.addr %s735, 8
        %s737 = scalar_lea.vmem [#allocation21], %s736
        %p738 = scmp.lt.s32.totalorder %s42, 1
        %s739 = scalar_select %p738, %s42, 1
        %p740 = scmp.lt.s32.totalorder %s43, 1
        %s741 = scalar_select %p740, %s43, 1
        %s742 = smul.addr %s739, 2
        %s743 = sadd.s32 %s741, %s742
        %s744 = smul.addr %s743, 8
        %s745 = scalar_lea.vmem %s0, %s744
        %p746 = scmp.lt.s32.totalorder %s42, 1
        %s747 = scalar_select %p746, %s42, 1
        %p748 = scmp.lt.s32.totalorder %s44, 1
        %s749 = scalar_select %p748, %s44, 1
        %s750 = smul.addr %s747, 2
        %s751 = sadd.s32 %s749, %s750
        %s752 = smul.addr %s751, 8
        %s753 = scalar_lea.vmem %s1, %s752
        %p755 = scmp.eq.s32.totalorder %s44, 0
        // Predicated region
        $region129: #{tpu_custom_call.1} parent=91 // pred_check
          %p756 = pneg %p755
        $region130: #{tpu_custom_call.1} parent=91 // pred_check_branch
          %758 = sbr.rel (%p756) target = $region132
        $region131: #{tpu_custom_call.1} parent=91 // pred_region
          %vm759 = vcmask 7168
          %760 = vst.msk [vmem:[#allocation3] sm:$0xff] %vm759, -1e+30
          %761 = vst.msk [vmem:[#allocation3 + $0x8] sm:$0xff] %vm759, -1e+30
          %762 = vst.msk [vmem:[#allocation3 + $0x10] sm:$0xff] %vm759, -1e+30
          %763 = vst.msk [vmem:[#allocation3 + $0x18] sm:$0xff] %vm759, -1e+30
          %764 = vst.msk [vmem:[#allocation4] sm:$0xff] %vm759, 0.0
          %765 = vst.msk [vmem:[#allocation4 + $0x8] sm:$0xff] %vm759, 0.0
          %766 = vst.msk [vmem:[#allocation4 + $0x10] sm:$0xff] %vm759, 0.0
          %767 = vst.msk [vmem:[#allocation4 + $0x18] sm:$0xff] %vm759, 0.0
          %vm768 = vcmask 64512
          %769 = vst.msk [vmem:[#allocation5] sm:$0xff] %vm768, 0.0
          %770 = vst.msk [vmem:[#allocation5 + $0x8] sm:$0xff] %vm768, 0.0
          %771 = vst.msk [vmem:[#allocation5 + $0x10] sm:$0xff] %vm768, 0.0
          %772 = vst.msk [vmem:[#allocation5 + $0x18] sm:$0xff] %vm768, 0.0
          %v773 = vld [vmem:[%s745] sm:$0xff]
          %v774 = vld [vmem:[%s2] sm:$0x1]
          %v775 = vld [vmem:[#allocation6] sm:$0x1]
          %vm776 = vcmask 261120
          %v777 = vsel %vm776, %v773, 0.0
          %778 = vadd.xlane.f32.xlu0 %v777
          %v779 = vpop.xlane.xlu0 %778
          %v780 = vrcp.pop 32.0
          %v781 = vmul.f32 %v779, %v780
          %v782 = vsub.f32 %v773, %v781
          %v783 = vmul.f32 %v782, %v782
          %v784 = vsel %vm776, %v783, 0.0
          %785 = vadd.xlane.f32.xlu0 %v784
          %v786 = vpop.xlane.xlu0 %785
          %v787 = vmul.f32 %v786, %v780
          %v788 = vadd.f32 %v787, 1e-05
          %v789 = vrsqrt.pop %v788
          %v790 = vmul.f32 %v782, %v789
          %v792 = vlaneseq
          %v793 = vshrl.u32 %v792, 7
          %v794 = vsub.s32 0, %v793
          %v795 = vrot.slane %v774, %v794
          %v797 = vmul.f32 %v790, %v795
          %v799 = vlaneseq
          %v800 = vshrl.u32 %v799, 7
          %v801 = vsub.s32 0, %v800
          %v802 = vrot.slane %v775, %v801
          %v804 = vadd.f32 %v797, %v802
          %v805 = vpack.c.bf16 %v804, %v804
          %v806 = vld [vmem:[%s4] sm:$0xf]
          %v807 = vld [vmem:[%s4 + $0x4] sm:$0xf]
          %v808 = vld [vmem:[%s4 + $0x8] sm:$0xf]
          %v809 = vld [vmem:[%s4 + $0xc] sm:$0xf]
          %v810 = vld [vmem:[#allocation9] sm:$0x1]
          %v812 = vlaneseq
          %v813 = vshrl.u32 %v812, 7
          %v814 = vsub.s32 0, %v813
          %v815 = vrot.slane %v810, %v814
          %v821 = vunpack.c.l.b16 %v806
          %v822 = vunpack.c.l.b16 %v807
          %v823 = vunpack.c.l.b16 %v808
          %v824 = vunpack.c.l.b16 %v809
          %v825 = vpack.c.b16 %v822, %v821
          %v826 = vpack.c.b16 %v824, %v823
          %v830 = vsel %vm776, %v805, 0
          %832 = vmatprep.subr.bf16.mxu0 0
          %833 = vmatpush1.bf16.msra.mxu0 %v825
          %834 = vmatprep.subr.bf16.mxu0 0
          %835 = vmatpush1.bf16.msra.mxu0 %v826
          %836 = vmatprep.subr.bf16.mxu0 0
          %837 = vmatpush1.bf16.msra.mxu0 0
          %838 = vmatprep.subr.bf16.mxu0 0
          %839 = vmatpush1.bf16.msra.mxu0 0
          %840 = vmatprep.subr.bf16.mxu0 0
          %841 = vmatpush1.bf16.msra.mxu0 0
          %842 = vmatprep.subr.bf16.mxu0 0
          %843 = vmatpush1.bf16.msra.mxu0 0
          %844 = vmatprep.subr.bf16.mxu0 0
          %845 = vmatpush1.bf16.msra.mxu0 0
          %846 = vmatprep.subr.bf16.mxu0 0
          %847 = vmatpush1.bf16.msra.mxu0 0
          %848 = vmatprep.subr.bf16.mxu0 0
          %849 = vmatpush1.bf16.msra.mxu0 0
          %850 = vmatprep.subr.bf16.mxu0 0
          %851 = vmatpush1.bf16.msra.mxu0 0
          %852 = vmatprep.subr.bf16.mxu0 0
          %853 = vmatpush1.bf16.msra.mxu0 0
          %854 = vmatprep.subr.bf16.mxu0 0
          %855 = vmatpush1.bf16.msra.mxu0 0
          %856 = vmatprep.subr.bf16.mxu0 0
          %857 = vmatpush1.bf16.msra.mxu0 0
          %858 = vmatprep.subr.bf16.mxu0 0
          %859 = vmatpush1.bf16.msra.mxu0 0
          %860 = vmatprep.subr.bf16.mxu0 0
          %861 = vmatpush1.bf16.msra.mxu0 0
          %862 = vmatprep.subr.bf16.mxu0 0
          %863 = vmatpush1.bf16.msra.mxu0 0
          %864 = vmatprep.mubr.bf16.mxu0 0
          %865 = vmatmul.mubr.bf16.gmra.mrb[0].mxu0 %v830
          %v866 = vpop.f32.mrb[0].mxu0
          %v867 = vadd.f32 %v815, %v866
          %v868 = vpop.f32.mrb[0].mxu0
          %v869 = vpop.f32.mrb[0].mxu0
          %v870 = vpop.f32.mrb[0].mxu0
          %871 = vdwg.mxu0
          %v872 = vmul.f32 %v867, 0.35355338
          %874 = vrot.lane.b32.xlu0 %v872, 120
          %v875 = vpop.permute.xlu0 %874
          %877 = vrot.lane.b32.xlu0 %v872, 112
          %v878 = vpop.permute.xlu0 %877
          %880 = vrot.lane.b32.xlu0 %v872, 104
          %v881 = vpop.permute.xlu0 %880
          %v883 = vpack.c.bf16 %v872, %v872
          %v884 = vpack.c.bf16 %v875, %v875
          %v885 = vpack.c.bf16 %v878, %v878
          %v886 = vpack.c.bf16 %v881, %v881
          %vm887 = vcmask 60416
          %888 = vst.msk [vmem:[#allocation2] sm:$0xf] %vm887, %v883
          %889 = vst.msk [vmem:[#allocation2 + $0x4] sm:$0xf] %vm887, %v884
          %890 = vst.msk [vmem:[#allocation2 + $0x8] sm:$0xf] %vm887, %v885
          %891 = vst.msk [vmem:[#allocation2 + $0xc] sm:$0xf] %vm887, %v886
        $region132: #{tpu_custom_call.1} parent=91 // pred_fallthru
          _
        %s892 = smul.u32 %s44, 8
        %s893 = smul.u32 %s43, 8
        %s894 = sadd.s32 %s893, 7
        %p895 = scmp.le.s32.totalorder %s892, %s894
        // Predicated region
        $region133: #{tpu_custom_call.1} parent=91 // pred_check
          %p896 = pneg %p895
        $region134: #{tpu_custom_call.1} parent=91 // pred_check_branch
          %898 = sbr.rel (%p896) target = $region136
        $region135: #{tpu_custom_call.1} parent=91 // pred_region
          %v899 = vld [vmem:[%s753] sm:$0xff]
          %v900 = vld [vmem:[%s2] sm:$0x1]
          %v901 = vld [vmem:[#allocation6] sm:$0x1]
          %vm902 = vcmask 261120
          %v903 = vsel %vm902, %v899, 0.0
          %904 = vadd.xlane.f32.xlu0 %v903
          %v905 = vpop.xlane.xlu0 %904
          %v906 = vrcp.pop 32.0
          %v907 = vmul.f32 %v905, %v906
          %v908 = vsub.f32 %v899, %v907
          %v909 = vmul.f32 %v908, %v908
          %v910 = vsel %vm902, %v909, 0.0
          %911 = vadd.xlane.f32.xlu0 %v910
          %v912 = vpop.xlane.xlu0 %911
          %v913 = vmul.f32 %v912, %v906
          %v914 = vadd.f32 %v913, 1e-05
          %v915 = vrsqrt.pop %v914
          %v916 = vmul.f32 %v908, %v915
          %v918 = vlaneseq
          %v919 = vshrl.u32 %v918, 7
          %v920 = vsub.s32 0, %v919
          %v921 = vrot.slane %v900, %v920
          %v923 = vmul.f32 %v916, %v921
          %v925 = vlaneseq
          %v926 = vshrl.u32 %v925, 7
          %v927 = vsub.s32 0, %v926
          %v928 = vrot.slane %v901, %v927
          %v930 = vadd.f32 %v923, %v928
          %v931 = vpack.c.bf16 %v930, %v930
          %v932 = vld [vmem:[#allocation11] sm:$0xf]
          %v933 = vld [vmem:[#allocation11 + $0x4] sm:$0xf]
          %v934 = vld [vmem:[#allocation11 + $0x8] sm:$0xf]
          %v935 = vld [vmem:[#allocation11 + $0xc] sm:$0xf]
          %v936 = vld [vmem:[#allocation12] sm:$0x1]
          %v938 = vlaneseq
          %v939 = vshrl.u32 %v938, 7
          %v940 = vsub.s32 0, %v939
          %v941 = vrot.slane %v936, %v940
          %v947 = vunpack.c.l.b16 %v932
          %v948 = vunpack.c.l.b16 %v933
          %v949 = vunpack.c.l.b16 %v934
          %v950 = vunpack.c.l.b16 %v935
          %v951 = vpack.c.b16 %v948, %v947
          %v952 = vpack.c.b16 %v950, %v949
          %v956 = vsel %vm902, %v931, 0
          %958 = vmatprep.subr.bf16.mxu0 0
          %959 = vmatpush1.bf16.msra.mxu0 %v951
          %960 = vmatprep.subr.bf16.mxu0 0
          %961 = vmatpush1.bf16.msra.mxu0 %v952
          %962 = vmatprep.subr.bf16.mxu0 0
          %963 = vmatpush1.bf16.msra.mxu0 0
          %964 = vmatprep.subr.bf16.mxu0 0
          %965 = vmatpush1.bf16.msra.mxu0 0
          %966 = vmatprep.subr.bf16.mxu0 0
          %967 = vmatpush1.bf16.msra.mxu0 0
          %968 = vmatprep.subr.bf16.mxu0 0
          %969 = vmatpush1.bf16.msra.mxu0 0
          %970 = vmatprep.subr.bf16.mxu0 0
          %971 = vmatpush1.bf16.msra.mxu0 0
          %972 = vmatprep.subr.bf16.mxu0 0
          %973 = vmatpush1.bf16.msra.mxu0 0
          %974 = vmatprep.subr.bf16.mxu0 0
          %975 = vmatpush1.bf16.msra.mxu0 0
          %976 = vmatprep.subr.bf16.mxu0 0
          %977 = vmatpush1.bf16.msra.mxu0 0
          %978 = vmatprep.subr.bf16.mxu0 0
          %979 = vmatpush1.bf16.msra.mxu0 0
          %980 = vmatprep.subr.bf16.mxu0 0
          %981 = vmatpush1.bf16.msra.mxu0 0
          %982 = vmatprep.subr.bf16.mxu0 0
          %983 = vmatpush1.bf16.msra.mxu0 0
          %984 = vmatprep.subr.bf16.mxu0 0
          %985 = vmatpush1.bf16.msra.mxu0 0
          %986 = vmatprep.subr.bf16.mxu0 0
          %987 = vmatpush1.bf16.msra.mxu0 0
          %988 = vmatprep.subr.bf16.mxu0 0
          %989 = vmatpush1.bf16.msra.mxu0 0
          %990 = vmatprep.mubr.bf16.mxu0 0
          %991 = vmatmul.mubr.bf16.gmra.mrb[0].mxu0 %v956
          %v992 = vpop.f32.mrb[0].mxu0
          %v993 = vadd.f32 %v941, %v992
          %v994 = vpop.f32.mrb[0].mxu0
          %v995 = vpop.f32.mrb[0].mxu0
          %v996 = vpop.f32.mrb[0].mxu0
          %997 = vdwg.mxu0
          %v998 = vld [vmem:[#allocation14] sm:$0xf]
          %v999 = vld [vmem:[#allocation14 + $0x4] sm:$0xf]
          %v1000 = vld [vmem:[#allocation14 + $0x8] sm:$0xf]
          %v1001 = vld [vmem:[#allocation14 + $0xc] sm:$0xf]
          %v1002 = vld [vmem:[#allocation15] sm:$0x1]
          %v1004 = vlaneseq
          %v1005 = vshrl.u32 %v1004, 7
          %v1006 = vsub.s32 0, %v1005
          %v1007 = vrot.slane %v1002, %v1006
          %v1013 = vunpack.c.l.b16 %v998
          %v1014 = vunpack.c.l.b16 %v999
          %v1015 = vunpack.c.l.b16 %v1000
          %v1016 = vunpack.c.l.b16 %v1001
          %v1017 = vpack.c.b16 %v1014, %v1013
          %v1018 = vpack.c.b16 %v1016, %v1015
          %1021 = vmatprep.subr.bf16.mxu0 0
          %1022 = vmatpush1.bf16.msra.mxu0 %v1017
          %1023 = vmatprep.subr.bf16.mxu0 0
          %1024 = vmatpush1.bf16.msra.mxu0 %v1018
          %1025 = vmatprep.subr.bf16.mxu0 0
          %1026 = vmatpush1.bf16.msra.mxu0 0
          %1027 = vmatprep.subr.bf16.mxu0 0
          %1028 = vmatpush1.bf16.msra.mxu0 0
          %1029 = vmatprep.subr.bf16.mxu0 0
          %1030 = vmatpush1.bf16.msra.mxu0 0
          %1031 = vmatprep.subr.bf16.mxu0 0
          %1032 = vmatpush1.bf16.msra.mxu0 0
          %1033 = vmatprep.subr.bf16.mxu0 0
          %1034 = vmatpush1.bf16.msra.mxu0 0
          %1035 = vmatprep.subr.bf16.mxu0 0
          %1036 = vmatpush1.bf16.msra.mxu0 0
          %1037 = vmatprep.subr.bf16.mxu0 0
          %1038 = vmatpush1.bf16.msra.mxu0 0
          %1039 = vmatprep.subr.bf16.mxu0 0
          %1040 = vmatpush1.bf16.msra.mxu0 0
          %1041 = vmatprep.subr.bf16.mxu0 0
          %1042 = vmatpush1.bf16.msra.mxu0 0
          %1043 = vmatprep.subr.bf16.mxu0 0
          %1044 = vmatpush1.bf16.msra.mxu0 0
          %1045 = vmatprep.subr.bf16.mxu0 0
          %1046 = vmatpush1.bf16.msra.mxu0 0
          %1047 = vmatprep.subr.bf16.mxu0 0
          %1048 = vmatpush1.bf16.msra.mxu0 0
          %1049 = vmatprep.subr.bf16.mxu0 0
          %1050 = vmatpush1.bf16.msra.mxu0 0
          %1051 = vmatprep.subr.bf16.mxu0 0
          %1052 = vmatpush1.bf16.msra.mxu0 0
          %1053 = vmatprep.mubr.bf16.mxu0 0
          %1054 = vmatmul.mubr.bf16.gmra.mrb[0].mxu0 %v956
          %v1055 = vpop.f32.mrb[0].mxu0
          %v1056 = vadd.f32 %v1007, %v1055
          %v1057 = vpop.f32.mrb[0].mxu0
          %v1058 = vpop.f32.mrb[0].mxu0
          %v1059 = vpop.f32.mrb[0].mxu0
          %1060 = vdwg.mxu0
          %1062 = vrot.lane.b32.xlu0 %v993, 120
          %v1063 = vpop.permute.xlu0 %1062
          %1065 = vrot.lane.b32.xlu0 %v993, 112
          %v1066 = vpop.permute.xlu0 %1065
          %1068 = vrot.lane.b32.xlu0 %v993, 104
          %v1069 = vpop.permute.xlu0 %1068
          %v1071 = vpack.c.bf16 %v993, %v993
          %v1072 = vpack.c.bf16 %v1063, %v1063
          %v1073 = vpack.c.bf16 %v1066, %v1066
          %v1074 = vpack.c.bf16 %v1069, %v1069
          %1076 = vrot.lane.b32.xlu0 %v1056, 120
          %v1077 = vpop.permute.xlu0 %1076
          %1079 = vrot.lane.b32.xlu0 %v1056, 112
          %v1080 = vpop.permute.xlu0 %1079
          %1082 = vrot.lane.b32.xlu0 %v1056, 104
          %v1083 = vpop.permute.xlu0 %1082
          %v1085 = vpack.c.bf16 %v1056, %v1056
          %v1086 = vpack.c.bf16 %v1077, %v1077
          %v1087 = vpack.c.bf16 %v1080, %v1080
          %v1088 = vpack.c.bf16 %v1083, %v1083
          %v1089 = vld [vmem:[#allocation2] sm:$0xf]
          %v1090 = vld [vmem:[#allocation2 + $0x4] sm:$0xf]
          %v1091 = vld [vmem:[#allocation2 + $0x8] sm:$0xf]
          %v1092 = vld [vmem:[#allocation2 + $0xc] sm:$0xf]
          %vm1093 = vcmask 64512
          %v1095 = vsel %vm1093, %v1089, 0
          %v1098 = vsel %vm1093, %v1071, 0
          %1100 = vmatprep.subr.bf16.mxu0 0
          %1101 = vmatpush1.bf16.xpose.msra.mxu0 %v1098
          %1102 = vmatprep.subr.bf16.mxu0 0
          %1103 = vmatpush1.bf16.xpose.msra.mxu0 0
          %1104 = vmatprep.subr.bf16.mxu0 0
          %1105 = vmatpush1.bf16.xpose.msra.mxu0 0
          %1106 = vmatprep.subr.bf16.mxu0 0
          %1107 = vmatpush1.bf16.xpose.msra.mxu0 0
          %1108 = vmatprep.subr.bf16.mxu0 0
          %1109 = vmatpush1.bf16.xpose.msra.mxu0 0
          %1110 = vmatprep.subr.bf16.mxu0 0
          %1111 = vmatpush1.bf16.xpose.msra.mxu0 0
          %1112 = vmatprep.subr.bf16.mxu0 0
          %1113 = vmatpush1.bf16.xpose.msra.mxu0 0
          %1114 = vmatprep.subr.bf16.mxu0 0
          %1115 = vmatpush1.bf16.xpose.msra.mxu0 0
          %1116 = vmatprep.subr.bf16.mxu0 0
          %1117 = vmatpush1.bf16.xpose.msra.mxu0 0
          %1118 = vmatprep.subr.bf16.mxu0 0
          %1119 = vmatpush1.bf16.xpose.msra.mxu0 0
          %1120 = vmatprep.subr.bf16.mxu0 0
          %1121 = vmatpush1.bf16.xpose.msra.mxu0 0
          %1122 = vmatprep.subr.bf16.mxu0 0
          %1123 = vmatpush1.bf16.xpose.msra.mxu0 0
          %1124 = vmatprep.subr.bf16.mxu0 0
          %1125 = vmatpush1.bf16.xpose.msra.mxu0 0
          %1126 = vmatprep.subr.bf16.mxu0 0
          %1127 = vmatpush1.bf16.xpose.msra.mxu0 0
          %1128 = vmatprep.subr.bf16.mxu0 0
          %1129 = vmatpush1.bf16.xpose.msra.mxu0 0
          %1130 = vmatprep.subr.bf16.mxu0 0
          %1131 = vmatpush1.bf16.xpose.msra.mxu0 0
          %1132 = vmatprep.mubr.bf16.mxu0 0
          %1133 = vmatmul.mubr.bf16.gmra.mrb[0].mxu0 %v1095
          %v1134 = vpop.f32.mrb[0].mxu0
          %v1135 = vadd.f32 0.0, %v1134
          %v1136 = vpop.f32.mrb[0].mxu0
          %v1137 = vpop.f32.mrb[0].mxu0
          %v1138 = vpop.f32.mrb[0].mxu0
          %1139 = vdwg.mxu0
          %v1141 = vsel %vm1093, %v1090, 0
          %v1144 = vsel %vm1093, %v1072, 0
          %1146 = vmatprep.subr.bf16.mxu0 0
          %1147 = vmatpush1.bf16.xpose.msra.mxu0 %v1144
          %1148 = vmatprep.subr.bf16.mxu0 0
          %1149 = vmatpush1.bf16.xpose.msra.mxu0 0
          %1150 = vmatprep.subr.bf16.mxu0 0
          %1151 = vmatpush1.bf16.xpose.msra.mxu0 0
          %1152 = vmatprep.subr.bf16.mxu0 0
          %1153 = vmatpush1.bf16.xpose.msra.mxu0 0
          %1154 = vmatprep.subr.bf16.mxu0 0
          %1155 = vmatpush1.bf16.xpose.msra.mxu0 0
          %1156 = vmatprep.subr.bf16.mxu0 0
          %1157 = vmatpush1.bf16.xpose.msra.mxu0 0
          %1158 = vmatprep.subr.bf16.mxu0 0
          %1159 = vmatpush1.bf16.xpose.msra.mxu0 0
          %1160 = vmatprep.subr.bf16.mxu0 0
          %1161 = vmatpush1.bf16.xpose.msra.mxu0 0
          %1162 = vmatprep.subr.bf16.mxu0 0
          %1163 = vmatpush1.bf16.xpose.msra.mxu0 0
          %1164 = vmatprep.subr.bf16.mxu0 0
          %1165 = vmatpush1.bf16.xpose.msra.mxu0 0
          %1166 = vmatprep.subr.bf16.mxu0 0
          %1167 = vmatpush1.bf16.xpose.msra.mxu0 0
          %1168 = vmatprep.subr.bf16.mxu0 0
          %1169 = vmatpush1.bf16.xpose.msra.mxu0 0
          %1170 = vmatprep.subr.bf16.mxu0 0
          %1171 = vmatpush1.bf16.xpose.msra.mxu0 0
          %1172 = vmatprep.subr.bf16.mxu0 0
          %1173 = vmatpush1.bf16.xpose.msra.mxu0 0
          %1174 = vmatprep.subr.bf16.mxu0 0
          %1175 = vmatpush1.bf16.xpose.msra.mxu0 0
          %1176 = vmatprep.subr.bf16.mxu0 0
          %1177 = vmatpush1.bf16.xpose.msra.mxu0 0
          %1178 = vmatprep.mubr.bf16.mxu0 0
          %1179 = vmatmul.mubr.bf16.gmra.mrb[0].mxu0 %v1141
          %v1180 = vpop.f32.mrb[0].mxu0
          %v1181 = vadd.f32 0.0, %v1180
          %v1182 = vpop.f32.mrb[0].mxu0
          %v1183 = vpop.f32.mrb[0].mxu0
          %v1184 = vpop.f32.mrb[0].mxu0
          %1185 = vdwg.mxu0
          %v1187 = vsel %vm1093, %v1091, 0
          %v1190 = vsel %vm1093, %v1073, 0
          %1192 = vmatprep.subr.bf16.mxu0 0
          %1193 = vmatpush1.bf16.xpose.msra.mxu0 %v1190
          %1194 = vmatprep.subr.bf16.mxu0 0
          %1195 = vmatpush1.bf16.xpose.msra.mxu0 0
          %1196 = vmatprep.subr.bf16.mxu0 0
          %1197 = vmatpush1.bf16.xpose.msra.mxu0 0
          %1198 = vmatprep.subr.bf16.mxu0 0
          %1199 = vmatpush1.bf16.xpose.msra.mxu0 0
          %1200 = vmatprep.subr.bf16.mxu0 0
          %1201 = vmatpush1.bf16.xpose.msra.mxu0 0
          %1202 = vmatprep.subr.bf16.mxu0 0
          %1203 = vmatpush1.bf16.xpose.msra.mxu0 0
          %1204 = vmatprep.subr.bf16.mxu0 0
          %1205 = vmatpush1.bf16.xpose.msra.mxu0 0
          %1206 = vmatprep.subr.bf16.mxu0 0
          %1207 = vmatpush1.bf16.xpose.msra.mxu0 0
          %1208 = vmatprep.subr.bf16.mxu0 0
          %1209 = vmatpush1.bf16.xpose.msra.mxu0 0
          %1210 = vmatprep.subr.bf16.mxu0 0
          %1211 = vmatpush1.bf16.xpose.msra.mxu0 0
          %1212 = vmatprep.subr.bf16.mxu0 0
          %1213 = vmatpush1.bf16.xpose.msra.mxu0 0
          %1214 = vmatprep.subr.bf16.mxu0 0
          %1215 = vmatpush1.bf16.xpose.msra.mxu0 0
          %1216 = vmatprep.subr.bf16.mxu0 0
          %1217 = vmatpush1.bf16.xpose.msra.mxu0 0
          %1218 = vmatprep.subr.bf16.mxu0 0
          %1219 = vmatpush1.bf16.xpose.msra.mxu0 0
          %1220 = vmatprep.subr.bf16.mxu0 0
          %1221 = vmatpush1.bf16.xpose.msra.mxu0 0
          %1222 = vmatprep.subr.bf16.mxu0 0
          %1223 = vmatpush1.bf16.xpose.msra.mxu0 0
          %1224 = vmatprep.mubr.bf16.mxu0 0
          %1225 = vmatmul.mubr.bf16.gmra.mrb[0].mxu0 %v1187
          %v1226 = vpop.f32.mrb[0].mxu0
          %v1227 = vadd.f32 0.0, %v1226
          %v1228 = vpop.f32.mrb[0].mxu0
          %v1229 = vpop.f32.mrb[0].mxu0
          %v1230 = vpop.f32.mrb[0].mxu0
          %1231 = vdwg.mxu0
          %v1233 = vsel %vm1093, %v1092, 0
          %v1236 = vsel %vm1093, %v1074, 0
          %1238 = vmatprep.subr.bf16.mxu0 0
          %1239 = vmatpush1.bf16.xpose.msra.mxu0 %v1236
          %1240 = vmatprep.subr.bf16.mxu0 0
          %1241 = vmatpush1.bf16.xpose.msra.mxu0 0
          %1242 = vmatprep.subr.bf16.mxu0 0
          %1243 = vmatpush1.bf16.xpose.msra.mxu0 0
          %1244 = vmatprep.subr.bf16.mxu0 0
          %1245 = vmatpush1.bf16.xpose.msra.mxu0 0
          %1246 = vmatprep.subr.bf16.mxu0 0
          %1247 = vmatpush1.bf16.xpose.msra.mxu0 0
          %1248 = vmatprep.subr.bf16.mxu0 0
          %1249 = vmatpush1.bf16.xpose.msra.mxu0 0
          %1250 = vmatprep.subr.bf16.mxu0 0
          %1251 = vmatpush1.bf16.xpose.msra.mxu0 0
          %1252 = vmatprep.subr.bf16.mxu0 0
          %1253 = vmatpush1.bf16.xpose.msra.mxu0 0
          %1254 = vmatprep.subr.bf16.mxu0 0
          %1255 = vmatpush1.bf16.xpose.msra.mxu0 0
          %1256 = vmatprep.subr.bf16.mxu0 0
          %1257 = vmatpush1.bf16.xpose.msra.mxu0 0
          %1258 = vmatprep.subr.bf16.mxu0 0
          %1259 = vmatpush1.bf16.xpose.msra.mxu0 0
          %1260 = vmatprep.subr.bf16.mxu0 0
          %1261 = vmatpush1.bf16.xpose.msra.mxu0 0
          %1262 = vmatprep.subr.bf16.mxu0 0
          %1263 = vmatpush1.bf16.xpose.msra.mxu0 0
          %1264 = vmatprep.subr.bf16.mxu0 0
          %1265 = vmatpush1.bf16.xpose.msra.mxu0 0
          %1266 = vmatprep.subr.bf16.mxu0 0
          %1267 = vmatpush1.bf16.xpose.msra.mxu0 0
          %1268 = vmatprep.subr.bf16.mxu0 0
          %1269 = vmatpush1.bf16.xpose.msra.mxu0 0
          %1270 = vmatprep.mubr.bf16.mxu0 0
          %1271 = vmatmul.mubr.bf16.gmra.mrb[0].mxu0 %v1233
          %v1272 = vpop.f32.mrb[0].mxu0
          %v1273 = vadd.f32 0.0, %v1272
          %v1274 = vpop.f32.mrb[0].mxu0
          %v1275 = vpop.f32.mrb[0].mxu0
          %v1276 = vpop.f32.mrb[0].mxu0
          %1277 = vdwg.mxu0
          %v1278 = vlaneseq
          %v1279 = vshrl.u32 %v1278, 7
          %v1280 = vstv %s893
          %v1281 = vadd.s32 %v1280, %v1279
          %v1282 = vlaneseq
          %v1283 = vand.u32 %v1282, 127
          %v1284 = vstv %s892
          %v1285 = vadd.s32 %v1284, %v1283
          %vm1286 = vcmp.ge.s32.totalorder %v1281, %v1285
          %v1287 = vsel %vm1286, 1, 0
          %vm1288 = vcmp.eq.s32.totalorder %v1287, 1
          %v1289 = vsel %vm1288, %v1135, -1e+30
          %v1290 = vsel %vm1288, %v1181, -1e+30
          %v1291 = vsel %vm1288, %v1227, -1e+30
          %v1292 = vsel %vm1288, %v1273, -1e+30
          %v1293 = vld [vmem:[#allocation3] sm:$0xff]
          %v1294 = vld [vmem:[#allocation3 + $0x8] sm:$0xff]
          %v1295 = vld [vmem:[#allocation3 + $0x10] sm:$0xff]
          %v1296 = vld [vmem:[#allocation3 + $0x18] sm:$0xff]
          %v1297 = vsel %vm1093, %v1289, -inf
          %1298 = vmax.xlane.f32.xlu0 %v1297
          %v1299 = vpop.xlane.xlu0 %1298
          %v1300 = vsel %vm1093, %v1290, -inf
          %1301 = vmax.xlane.f32.xlu0 %v1300
          %v1302 = vpop.xlane.xlu0 %1301
          %v1303 = vsel %vm1093, %v1291, -inf
          %1304 = vmax.xlane.f32.xlu0 %v1303
          %v1305 = vpop.xlane.xlu0 %1304
          %v1306 = vsel %vm1093, %v1292, -inf
          %1307 = vmax.xlane.f32.xlu0 %v1306
          %v1308 = vpop.xlane.xlu0 %1307
          %v1309 = vmax.f32 %v1293, %v1299
          %v1310 = vmax.f32 %v1294, %v1302
          %v1311 = vmax.f32 %v1295, %v1305
          %v1312 = vmax.f32 %v1296, %v1308
          %v1313 = vsub.f32 %v1293, %v1309
          %v1314 = vsub.f32 %v1294, %v1310
          %v1315 = vsub.f32 %v1295, %v1311
          %v1316 = vsub.f32 %v1296, %v1312
          %v1317 = vmul.f32 %v1313, 1.442695
          %v1318 = vpow.pop %v1317
          %v1319 = vmul.f32 %v1314, 1.442695
          %v1320 = vpow.pop %v1319
          %v1321 = vmul.f32 %v1315, 1.442695
          %v1322 = vpow.pop %v1321
          %v1323 = vmul.f32 %v1316, 1.442695
          %v1324 = vpow.pop %v1323
          %1326 = vset.pattern.permute.xlu0 0
          %1327 = vperm.xlu0 %1326, %v1309
          %v1328 = vpop.permute.xlu0 %1327
          %1331 = vset.pattern.permute.xlu0 0
          %1332 = vperm.xlu0 %1331, %v1310
          %v1333 = vpop.permute.xlu0 %1332
          %1336 = vset.pattern.permute.xlu0 0
          %1337 = vperm.xlu0 %1336, %v1311
          %v1338 = vpop.permute.xlu0 %1337
          %1341 = vset.pattern.permute.xlu0 0
          %1342 = vperm.xlu0 %1341, %v1312
          %v1343 = vpop.permute.xlu0 %1342
          %v1345 = vsub.f32 %v1289, %v1328
          %v1346 = vsub.f32 %v1290, %v1333
          %v1347 = vsub.f32 %v1291, %v1338
          %v1348 = vsub.f32 %v1292, %v1343
          %v1349 = vmul.f32 %v1345, 1.442695
          %v1350 = vpow.pop %v1349
          %v1351 = vmul.f32 %v1346, 1.442695
          %v1352 = vpow.pop %v1351
          %v1353 = vmul.f32 %v1347, 1.442695
          %v1354 = vpow.pop %v1353
          %v1355 = vmul.f32 %v1348, 1.442695
          %v1356 = vpow.pop %v1355
          %v1357 = vld [vmem:[#allocation4] sm:$0xff]
          %v1358 = vld [vmem:[#allocation4 + $0x8] sm:$0xff]
          %v1359 = vld [vmem:[#allocation4 + $0x10] sm:$0xff]
          %v1360 = vld [vmem:[#allocation4 + $0x18] sm:$0xff]
          %v1361 = vmul.f32 %v1318, %v1357
          %v1362 = vmul.f32 %v1320, %v1358
          %v1363 = vmul.f32 %v1322, %v1359
          %v1364 = vmul.f32 %v1324, %v1360
          %v1365 = vsel %vm1093, %v1350, 0.0
          %1366 = vadd.xlane.f32.xlu0 %v1365
          %v1367 = vpop.xlane.xlu0 %1366
          %v1368 = vsel %vm1093, %v1352, 0.0
          %1369 = vadd.xlane.f32.xlu0 %v1368
          %v1370 = vpop.xlane.xlu0 %1369
          %v1371 = vsel %vm1093, %v1354, 0.0
          %1372 = vadd.xlane.f32.xlu0 %v1371
          %v1373 = vpop.xlane.xlu0 %1372
          %v1374 = vsel %vm1093, %v1356, 0.0
          %1375 = vadd.xlane.f32.xlu0 %v1374
          %v1376 = vpop.xlane.xlu0 %1375
          %v1377 = vadd.f32 %v1361, %v1367
          %v1378 = vadd.f32 %v1362, %v1370
          %v1379 = vadd.f32 %v1363, %v1373
          %v1380 = vadd.f32 %v1364, %v1376
          %vm1381 = vcmask 7168
          %1382 = vst.msk [vmem:[#allocation4] sm:$0xff] %vm1381, %v1377
          %1383 = vst.msk [vmem:[#allocation4 + $0x8] sm:$0xff] %vm1381, %v1378
          %1384 = vst.msk [vmem:[#allocation4 + $0x10] sm:$0xff] %vm1381, %v1379
          %1385 = vst.msk [vmem:[#allocation4 + $0x18] sm:$0xff] %vm1381, %v1380
          %v1386 = vld [vmem:[#allocation5] sm:$0xff]
          %v1387 = vld [vmem:[#allocation5 + $0x8] sm:$0xff]
          %v1388 = vld [vmem:[#allocation5 + $0x10] sm:$0xff]
          %v1389 = vld [vmem:[#allocation5 + $0x18] sm:$0xff]
          %1391 = vset.pattern.permute.xlu0 0
          %1392 = vperm.xlu0 %1391, %v1318
          %v1393 = vpop.permute.xlu0 %1392
          %1396 = vset.pattern.permute.xlu0 0
          %1397 = vperm.xlu0 %1396, %v1320
          %v1398 = vpop.permute.xlu0 %1397
          %1401 = vset.pattern.permute.xlu0 0
          %1402 = vperm.xlu0 %1401, %v1322
          %v1403 = vpop.permute.xlu0 %1402
          %1406 = vset.pattern.permute.xlu0 0
          %1407 = vperm.xlu0 %1406, %v1324
          %v1408 = vpop.permute.xlu0 %1407
          %v1410 = vmul.f32 %v1393, %v1386
          %v1411 = vmul.f32 %v1398, %v1387
          %v1412 = vmul.f32 %v1403, %v1388
          %v1413 = vmul.f32 %v1408, %v1389
          %v1414 = vpack.c.bf16 %v1350, %v1350
          %v1415 = vpack.c.bf16 %v1352, %v1352
          %v1416 = vpack.c.bf16 %v1354, %v1354
          %v1417 = vpack.c.bf16 %v1356, %v1356
          %v1419 = vsel %vm1093, %v1414, 0
          %vm1421 = vcmask 1043456
          %v1423 = vsel %vm1421, %v1085, 0
          %1425 = vmatprep.subr.bf16.mxu0 0
          %1426 = vmatpush1.bf16.msra.mxu0 %v1423
          %1427 = vmatprep.subr.bf16.mxu0 0
          %1428 = vmatpush1.bf16.msra.mxu0 0
          %1429 = vmatprep.subr.bf16.mxu0 0
          %1430 = vmatpush1.bf16.msra.mxu0 0
          %1431 = vmatprep.subr.bf16.mxu0 0
          %1432 = vmatpush1.bf16.msra.mxu0 0
          %1433 = vmatprep.subr.bf16.mxu0 0
          %1434 = vmatpush1.bf16.msra.mxu0 0
          %1435 = vmatprep.subr.bf16.mxu0 0
          %1436 = vmatpush1.bf16.msra.mxu0 0
          %1437 = vmatprep.subr.bf16.mxu0 0
          %1438 = vmatpush1.bf16.msra.mxu0 0
          %1439 = vmatprep.subr.bf16.mxu0 0
          %1440 = vmatpush1.bf16.msra.mxu0 0
          %1441 = vmatprep.subr.bf16.mxu0 0
          %1442 = vmatpush1.bf16.msra.mxu0 0
          %1443 = vmatprep.subr.bf16.mxu0 0
          %1444 = vmatpush1.bf16.msra.mxu0 0
          %1445 = vmatprep.subr.bf16.mxu0 0
          %1446 = vmatpush1.bf16.msra.mxu0 0
          %1447 = vmatprep.subr.bf16.mxu0 0
          %1448 = vmatpush1.bf16.msra.mxu0 0
          %1449 = vmatprep.subr.bf16.mxu0 0
          %1450 = vmatpush1.bf16.msra.mxu0 0
          %1451 = vmatprep.subr.bf16.mxu0 0
          %1452 = vmatpush1.bf16.msra.mxu0 0
          %1453 = vmatprep.subr.bf16.mxu0 0
          %1454 = vmatpush1.bf16.msra.mxu0 0
          %1455 = vmatprep.subr.bf16.mxu0 0
          %1456 = vmatpush1.bf16.msra.mxu0 0
          %1457 = vmatprep.mubr.bf16.mxu0 0
          %1458 = vmatmul.mubr.bf16.gmra.mrb[0].mxu0 %v1419
          %v1459 = vpop.f32.mrb[0].mxu0
          %v1460 = vadd.f32 0.0, %v1459
          %v1461 = vpop.f32.mrb[0].mxu0
          %v1462 = vpop.f32.mrb[0].mxu0
          %v1463 = vpop.f32.mrb[0].mxu0
          %1464 = vdwg.mxu0
          %v1466 = vsel %vm1093, %v1415, 0
          %v1469 = vsel %vm1421, %v1086, 0
          %1471 = vmatprep.subr.bf16.mxu0 0
          %1472 = vmatpush1.bf16.msra.mxu0 %v1469
          %1473 = vmatprep.subr.bf16.mxu0 0
          %1474 = vmatpush1.bf16.msra.mxu0 0
          %1475 = vmatprep.subr.bf16.mxu0 0
          %1476 = vmatpush1.bf16.msra.mxu0 0
          %1477 = vmatprep.subr.bf16.mxu0 0
          %1478 = vmatpush1.bf16.msra.mxu0 0
          %1479 = vmatprep.subr.bf16.mxu0 0
          %1480 = vmatpush1.bf16.msra.mxu0 0
          %1481 = vmatprep.subr.bf16.mxu0 0
          %1482 = vmatpush1.bf16.msra.mxu0 0
          %1483 = vmatprep.subr.bf16.mxu0 0
          %1484 = vmatpush1.bf16.msra.mxu0 0
          %1485 = vmatprep.subr.bf16.mxu0 0
          %1486 = vmatpush1.bf16.msra.mxu0 0
          %1487 = vmatprep.subr.bf16.mxu0 0
          %1488 = vmatpush1.bf16.msra.mxu0 0
          %1489 = vmatprep.subr.bf16.mxu0 0
          %1490 = vmatpush1.bf16.msra.mxu0 0
          %1491 = vmatprep.subr.bf16.mxu0 0
          %1492 = vmatpush1.bf16.msra.mxu0 0
          %1493 = vmatprep.subr.bf16.mxu0 0
          %1494 = vmatpush1.bf16.msra.mxu0 0
          %1495 = vmatprep.subr.bf16.mxu0 0
          %1496 = vmatpush1.bf16.msra.mxu0 0
          %1497 = vmatprep.subr.bf16.mxu0 0
          %1498 = vmatpush1.bf16.msra.mxu0 0
          %1499 = vmatprep.subr.bf16.mxu0 0
          %1500 = vmatpush1.bf16.msra.mxu0 0
          %1501 = vmatprep.subr.bf16.mxu0 0
          %1502 = vmatpush1.bf16.msra.mxu0 0
          %1503 = vmatprep.mubr.bf16.mxu0 0
          %1504 = vmatmul.mubr.bf16.gmra.mrb[0].mxu0 %v1466
          %v1505 = vpop.f32.mrb[0].mxu0
          %v1506 = vadd.f32 0.0, %v1505
          %v1507 = vpop.f32.mrb[0].mxu0
          %v1508 = vpop.f32.mrb[0].mxu0
          %v1509 = vpop.f32.mrb[0].mxu0
          %1510 = vdwg.mxu0
          %v1512 = vsel %vm1093, %v1416, 0
          %v1515 = vsel %vm1421, %v1087, 0
          %1517 = vmatprep.subr.bf16.mxu0 0
          %1518 = vmatpush1.bf16.msra.mxu0 %v1515
          %1519 = vmatprep.subr.bf16.mxu0 0
          %1520 = vmatpush1.bf16.msra.mxu0 0
          %1521 = vmatprep.subr.bf16.mxu0 0
          %1522 = vmatpush1.bf16.msra.mxu0 0
          %1523 = vmatprep.subr.bf16.mxu0 0
          %1524 = vmatpush1.bf16.msra.mxu0 0
          %1525 = vmatprep.subr.bf16.mxu0 0
          %1526 = vmatpush1.bf16.msra.mxu0 0
          %1527 = vmatprep.subr.bf16.mxu0 0
          %1528 = vmatpush1.bf16.msra.mxu0 0
          %1529 = vmatprep.subr.bf16.mxu0 0
          %1530 = vmatpush1.bf16.msra.mxu0 0
          %1531 = vmatprep.subr.bf16.mxu0 0
          %1532 = vmatpush1.bf16.msra.mxu0 0
          %1533 = vmatprep.subr.bf16.mxu0 0
          %1534 = vmatpush1.bf16.msra.mxu0 0
          %1535 = vmatprep.subr.bf16.mxu0 0
          %1536 = vmatpush1.bf16.msra.mxu0 0
          %1537 = vmatprep.subr.bf16.mxu0 0
          %1538 = vmatpush1.bf16.msra.mxu0 0
          %1539 = vmatprep.subr.bf16.mxu0 0
          %1540 = vmatpush1.bf16.msra.mxu0 0
          %1541 = vmatprep.subr.bf16.mxu0 0
          %1542 = vmatpush1.bf16.msra.mxu0 0
          %1543 = vmatprep.subr.bf16.mxu0 0
          %1544 = vmatpush1.bf16.msra.mxu0 0
          %1545 = vmatprep.subr.bf16.mxu0 0
          %1546 = vmatpush1.bf16.msra.mxu0 0
          %1547 = vmatprep.subr.bf16.mxu0 0
          %1548 = vmatpush1.bf16.msra.mxu0 0
          %1549 = vmatprep.mubr.bf16.mxu0 0
          %1550 = vmatmul.mubr.bf16.gmra.mrb[0].mxu0 %v1512
          %v1551 = vpop.f32.mrb[0].mxu0
          %v1552 = vadd.f32 0.0, %v1551
          %v1553 = vpop.f32.mrb[0].mxu0
          %v1554 = vpop.f32.mrb[0].mxu0
          %v1555 = vpop.f32.mrb[0].mxu0
          %1556 = vdwg.mxu0
          %v1558 = vsel %vm1093, %v1417, 0
          %v1561 = vsel %vm1421, %v1088, 0
          %1563 = vmatprep.subr.bf16.mxu0 0
          %1564 = vmatpush1.bf16.msra.mxu0 %v1561
          %1565 = vmatprep.subr.bf16.mxu0 0
          %1566 = vmatpush1.bf16.msra.mxu0 0
          %1567 = vmatprep.subr.bf16.mxu0 0
          %1568 = vmatpush1.bf16.msra.mxu0 0
          %1569 = vmatprep.subr.bf16.mxu0 0
          %1570 = vmatpush1.bf16.msra.mxu0 0
          %1571 = vmatprep.subr.bf16.mxu0 0
          %1572 = vmatpush1.bf16.msra.mxu0 0
          %1573 = vmatprep.subr.bf16.mxu0 0
          %1574 = vmatpush1.bf16.msra.mxu0 0
          %1575 = vmatprep.subr.bf16.mxu0 0
          %1576 = vmatpush1.bf16.msra.mxu0 0
          %1577 = vmatprep.subr.bf16.mxu0 0
          %1578 = vmatpush1.bf16.msra.mxu0 0
          %1579 = vmatprep.subr.bf16.mxu0 0
          %1580 = vmatpush1.bf16.msra.mxu0 0
          %1581 = vmatprep.subr.bf16.mxu0 0
          %1582 = vmatpush1.bf16.msra.mxu0 0
          %1583 = vmatprep.subr.bf16.mxu0 0
          %1584 = vmatpush1.bf16.msra.mxu0 0
          %1585 = vmatprep.subr.bf16.mxu0 0
          %1586 = vmatpush1.bf16.msra.mxu0 0
          %1587 = vmatprep.subr.bf16.mxu0 0
          %1588 = vmatpush1.bf16.msra.mxu0 0
          %1589 = vmatprep.subr.bf16.mxu0 0
          %1590 = vmatpush1.bf16.msra.mxu0 0
          %1591 = vmatprep.subr.bf16.mxu0 0
          %1592 = vmatpush1.bf16.msra.mxu0 0
          %1593 = vmatprep.subr.bf16.mxu0 0
          %1594 = vmatpush1.bf16.msra.mxu0 0
          %1595 = vmatprep.mubr.bf16.mxu0 0
          %1596 = vmatmul.mubr.bf16.gmra.mrb[0].mxu0 %v1558
          %v1597 = vpop.f32.mrb[0].mxu0
          %v1598 = vadd.f32 0.0, %v1597
          %v1599 = vpop.f32.mrb[0].mxu0
          %v1600 = vpop.f32.mrb[0].mxu0
          %v1601 = vpop.f32.mrb[0].mxu0
          %1602 = vdwg.mxu0
          %v1603 = vadd.f32 %v1410, %v1460
          %v1604 = vadd.f32 %v1411, %v1506
          %v1605 = vadd.f32 %v1412, %v1552
          %v1606 = vadd.f32 %v1413, %v1598
          %1607 = vst.msk [vmem:[#allocation5] sm:$0xff] %vm1093, %v1603
          %1608 = vst.msk [vmem:[#allocation5 + $0x8] sm:$0xff] %vm1093, %v1604
          %1609 = vst.msk [vmem:[#allocation5 + $0x10] sm:$0xff] %vm1093, %v1605
          %1610 = vst.msk [vmem:[#allocation5 + $0x18] sm:$0xff] %vm1093, %v1606
          %1611 = vst.msk [vmem:[#allocation3] sm:$0xff] %vm1381, %v1309
          %1612 = vst.msk [vmem:[#allocation3 + $0x8] sm:$0xff] %vm1381, %v1310
          %1613 = vst.msk [vmem:[#allocation3 + $0x10] sm:$0xff] %vm1381, %v1311
          %1614 = vst.msk [vmem:[#allocation3 + $0x18] sm:$0xff] %vm1381, %v1312
        $region136: #{tpu_custom_call.1} parent=91 // pred_fallthru
          _
        %p1615 = scmp.eq.s32.totalorder %s44, 1
        // Predicated region
        $region137: #{tpu_custom_call.1} parent=91 // pred_check
          %p1616 = pneg %p1615
        $region138: #{tpu_custom_call.1} parent=91 // pred_check_branch
          %1618 = sbr.rel (%p1616) target = $region140
        $region139: #{tpu_custom_call.1} parent=91 // pred_region
          %v1619 = vld [vmem:[#allocation5] sm:$0xff]
          %v1620 = vld [vmem:[#allocation5 + $0x8] sm:$0xff]
          %v1621 = vld [vmem:[#allocation5 + $0x10] sm:$0xff]
          %v1622 = vld [vmem:[#allocation5 + $0x18] sm:$0xff]
          %v1623 = vld [vmem:[#allocation4] sm:$0xff]
          %v1624 = vld [vmem:[#allocation4 + $0x8] sm:$0xff]
          %v1625 = vld [vmem:[#allocation4 + $0x10] sm:$0xff]
          %v1626 = vld [vmem:[#allocation4 + $0x18] sm:$0xff]
          %v1627 = vrcp.pop %v1623
          %v1628 = vrcp.pop %v1624
          %v1629 = vrcp.pop %v1625
          %v1630 = vrcp.pop %v1626
          %1632 = vset.pattern.permute.xlu0 0
          %1633 = vperm.xlu0 %1632, %v1627
          %v1634 = vpop.permute.xlu0 %1633
          %1637 = vset.pattern.permute.xlu0 0
          %1638 = vperm.xlu0 %1637, %v1628
          %v1639 = vpop.permute.xlu0 %1638
          %1642 = vset.pattern.permute.xlu0 0
          %1643 = vperm.xlu0 %1642, %v1629
          %v1644 = vpop.permute.xlu0 %1643
          %1647 = vset.pattern.permute.xlu0 0
          %1648 = vperm.xlu0 %1647, %v1630
          %v1649 = vpop.permute.xlu0 %1648
          %v1651 = vmul.f32 %v1619, %v1634
          %v1652 = vmul.f32 %v1620, %v1639
          %v1653 = vmul.f32 %v1621, %v1644
          %v1654 = vmul.f32 %v1622, %v1649
          %1656 = vrot.lane.b32.xlu0 %v1652, 8
          %v1657 = vpop.permute.xlu0 %1656
          %1660 = vrot.lane.b32.xlu0 %v1653, 16
          %v1661 = vpop.permute.xlu0 %1660
          %1664 = vrot.lane.b32.xlu0 %v1654, 24
          %v1665 = vpop.permute.xlu0 %1664
          %vm1667 = vcmask 64512
          %v1668 = vsel %vm1667, %v1651, %v1657
          %vm1669 = vcmask 130048
          %v1670 = vsel %vm1669, %v1668, %v1661
          %vm1671 = vcmask 195584
          %v1672 = vsel %vm1671, %v1670, %v1665
          %v1673 = vpack.c.bf16 %v1672, %v1672
          %v1674 = vld [vmem:[%s10] sm:$0xf]
          %v1675 = vld [vmem:[%s10 + $0x4] sm:$0xf]
          %v1676 = vld [vmem:[%s10 + $0x8] sm:$0xf]
          %v1677 = vld [vmem:[%s10 + $0xc] sm:$0xf]
          %v1678 = vld [vmem:[#allocation17] sm:$0x1]
          %v1680 = vlaneseq
          %v1681 = vshrl.u32 %v1680, 7
          %v1682 = vsub.s32 0, %v1681
          %v1683 = vrot.slane %v1678, %v1682
          %v1689 = vunpack.c.l.b16 %v1674
          %v1690 = vunpack.c.l.b16 %v1675
          %v1691 = vunpack.c.l.b16 %v1676
          %v1692 = vunpack.c.l.b16 %v1677
          %v1693 = vpack.c.b16 %v1690, %v1689
          %v1694 = vpack.c.b16 %v1692, %v1691
          %vm1697 = vcmask 261120
          %v1699 = vsel %vm1697, %v1673, 0
          %1701 = vmatprep.subr.bf16.mxu0 0
          %1702 = vmatpush1.bf16.msra.mxu0 %v1693
          %1703 = vmatprep.subr.bf16.mxu0 0
          %1704 = vmatpush1.bf16.msra.mxu0 %v1694
          %1705 = vmatprep.subr.bf16.mxu0 0
          %1706 = vmatpush1.bf16.msra.mxu0 0
          %1707 = vmatprep.subr.bf16.mxu0 0
          %1708 = vmatpush1.bf16.msra.mxu0 0
          %1709 = vmatprep.subr.bf16.mxu0 0
          %1710 = vmatpush1.bf16.msra.mxu0 0
          %1711 = vmatprep.subr.bf16.mxu0 0
          %1712 = vmatpush1.bf16.msra.mxu0 0
          %1713 = vmatprep.subr.bf16.mxu0 0
          %1714 = vmatpush1.bf16.msra.mxu0 0
          %1715 = vmatprep.subr.bf16.mxu0 0
          %1716 = vmatpush1.bf16.msra.mxu0 0
          %1717 = vmatprep.subr.bf16.mxu0 0
          %1718 = vmatpush1.bf16.msra.mxu0 0
          %1719 = vmatprep.subr.bf16.mxu0 0
          %1720 = vmatpush1.bf16.msra.mxu0 0
          %1721 = vmatprep.subr.bf16.mxu0 0
          %1722 = vmatpush1.bf16.msra.mxu0 0
          %1723 = vmatprep.subr.bf16.mxu0 0
          %1724 = vmatpush1.bf16.msra.mxu0 0
          %1725 = vmatprep.subr.bf16.mxu0 0
          %1726 = vmatpush1.bf16.msra.mxu0 0
          %1727 = vmatprep.subr.bf16.mxu0 0
          %1728 = vmatpush1.bf16.msra.mxu0 0
          %1729 = vmatprep.subr.bf16.mxu0 0
          %1730 = vmatpush1.bf16.msra.mxu0 0
          %1731 = vmatprep.subr.bf16.mxu0 0
          %1732 = vmatpush1.bf16.msra.mxu0 0
          %1733 = vmatprep.mubr.bf16.mxu0 0
          %1734 = vmatmul.mubr.bf16.gmra.mrb[0].mxu0 %v1699
          %v1735 = vpop.f32.mrb[0].mxu0
          %v1736 = vadd.f32 %v1683, %v1735
          %v1737 = vpop.f32.mrb[0].mxu0
          %v1738 = vpop.f32.mrb[0].mxu0
          %v1739 = vpop.f32.mrb[0].mxu0
          %1740 = vdwg.mxu0
          %v1741 = vld [vmem:[%s745] sm:$0xff]
          %v1742 = vadd.f32 %v1741, %v1736
          %v1743 = vld [vmem:[#allocation18] sm:$0x1]
          %v1744 = vld [vmem:[#allocation20] sm:$0x1]
          %v1745 = vsel %vm1697, %v1742, 0.0
          %1746 = vadd.xlane.f32.xlu0 %v1745
          %v1747 = vpop.xlane.xlu0 %1746
          %v1748 = vrcp.pop 32.0
          %v1749 = vmul.f32 %v1747, %v1748
          %v1750 = vsub.f32 %v1742, %v1749
          %v1751 = vmul.f32 %v1750, %v1750
          %v1752 = vsel %vm1697, %v1751, 0.0
          %1753 = vadd.xlane.f32.xlu0 %v1752
          %v1754 = vpop.xlane.xlu0 %1753
          %v1755 = vmul.f32 %v1754, %v1748
          %v1756 = vadd.f32 %v1755, 1e-05
          %v1757 = vrsqrt.pop %v1756
          %v1758 = vmul.f32 %v1750, %v1757
          %v1760 = vlaneseq
          %v1761 = vshrl.u32 %v1760, 7
          %v1762 = vsub.s32 0, %v1761
          %v1763 = vrot.slane %v1743, %v1762
          %v1765 = vmul.f32 %v1758, %v1763
          %v1767 = vlaneseq
          %v1768 = vshrl.u32 %v1767, 7
          %v1769 = vsub.s32 0, %v1768
          %v1770 = vrot.slane %v1744, %v1769
          %v1772 = vadd.f32 %v1765, %v1770
          %v1773 = vpack.c.bf16 %v1772, %v1772
          %v1774 = vld [vmem:[%s14] sm:$0xf]
          %v1775 = vld [vmem:[%s14 + $0x4] sm:$0xf]
          %v1776 = vld [vmem:[%s14 + $0x8] sm:$0xf]
          %v1777 = vld [vmem:[%s14 + $0xc] sm:$0xf]
          %v1778 = vld [vmem:[%s15] sm:$0x1]
          %v1780 = vlaneseq
          %v1781 = vshrl.u32 %v1780, 7
          %v1782 = vsub.s32 0, %v1781
          %v1783 = vrot.slane %v1778, %v1782
          %v1789 = vunpack.c.l.b16 %v1774
          %v1790 = vunpack.c.l.b16 %v1775
          %v1791 = vunpack.c.l.b16 %v1776
          %v1792 = vunpack.c.l.b16 %v1777
          %v1793 = vpack.c.b16 %v1790, %v1789
          %v1794 = vpack.c.b16 %v1792, %v1791
          %v1798 = vsel %vm1697, %v1773, 0
          %1800 = vmatprep.subr.bf16.mxu0 0
          %1801 = vmatpush1.bf16.msra.mxu0 %v1793
          %1802 = vmatprep.subr.bf16.mxu0 0
          %1803 = vmatpush1.bf16.msra.mxu0 %v1794
          %1804 = vmatprep.subr.bf16.mxu0 0
          %1805 = vmatpush1.bf16.msra.mxu0 0
          %1806 = vmatprep.subr.bf16.mxu0 0
          %1807 = vmatpush1.bf16.msra.mxu0 0
          %1808 = vmatprep.subr.bf16.mxu0 0
          %1809 = vmatpush1.bf16.msra.mxu0 0
          %1810 = vmatprep.subr.bf16.mxu0 0
          %1811 = vmatpush1.bf16.msra.mxu0 0
          %1812 = vmatprep.subr.bf16.mxu0 0
          %1813 = vmatpush1.bf16.msra.mxu0 0
          %1814 = vmatprep.subr.bf16.mxu0 0
          %1815 = vmatpush1.bf16.msra.mxu0 0
          %1816 = vmatprep.subr.bf16.mxu0 0
          %1817 = vmatpush1.bf16.msra.mxu0 0
          %1818 = vmatprep.subr.bf16.mxu0 0
          %1819 = vmatpush1.bf16.msra.mxu0 0
          %1820 = vmatprep.subr.bf16.mxu0 0
          %1821 = vmatpush1.bf16.msra.mxu0 0
          %1822 = vmatprep.subr.bf16.mxu0 0
          %1823 = vmatpush1.bf16.msra.mxu0 0
          %1824 = vmatprep.subr.bf16.mxu0 0
          %1825 = vmatpush1.bf16.msra.mxu0 0
          %1826 = vmatprep.subr.bf16.mxu0 0
          %1827 = vmatpush1.bf16.msra.mxu0 0
          %1828 = vmatprep.subr.bf16.mxu0 0
          %1829 = vmatpush1.bf16.msra.mxu0 0
          %1830 = vmatprep.subr.bf16.mxu0 0
          %1831 = vmatpush1.bf16.msra.mxu0 0
          %1832 = vmatprep.mubr.bf16.mxu0 0
          %1833 = vmatmul.mubr.bf16.gmra.mrb[0].mxu0 %v1798
          %v1834 = vpop.f32.mrb[0].mxu0
          %v1835 = vadd.f32 %v1783, %v1834
          %v1836 = vpop.f32.mrb[0].mxu0
          %v1837 = vpop.f32.mrb[0].mxu0
          %v1838 = vpop.f32.mrb[0].mxu0
          %1839 = vdwg.mxu0
          %v1840 = vmul.f32 %v1835, 0.5
          %v1841 = vmul.f32 %v1835, 0.044715
          %v1842 = vmul.f32 %v1841, %v1835
          %v1843 = vmul.f32 %v1842, %v1835
          %v1844 = vadd.f32 %v1835, %v1843
          %v1845 = vmul.f32 %v1844, 0.7978846
          %v1846 = vtanh.pop %v1845
          %v1847 = vadd.f32 %v1846, 1.0
          %v1848 = vmul.f32 %v1840, %v1847
          %v1849 = vpack.c.bf16 %v1848, %v1848
          %v1850 = vld [vmem:[%s16] sm:$0xf]
          %v1851 = vld [vmem:[%s16 + $0x4] sm:$0xf]
          %v1852 = vld [vmem:[%s16 + $0x8] sm:$0xf]
          %v1853 = vld [vmem:[%s16 + $0xc] sm:$0xf]
          %v1854 = vld [vmem:[%s16 + $0x10] sm:$0xf]
          %v1855 = vld [vmem:[%s16 + $0x14] sm:$0xf]
          %v1856 = vld [vmem:[%s16 + $0x18] sm:$0xf]
          %v1857 = vld [vmem:[%s16 + $0x1c] sm:$0xf]
          %v1858 = vld [vmem:[%s16 + $0x20] sm:$0xf]
          %v1859 = vld [vmem:[%s16 + $0x24] sm:$0xf]
          %v1860 = vld [vmem:[%s16 + $0x28] sm:$0xf]
          %v1861 = vld [vmem:[%s16 + $0x2c] sm:$0xf]
          %v1862 = vld [vmem:[%s16 + $0x30] sm:$0xf]
          %v1863 = vld [vmem:[%s16 + $0x34] sm:$0xf]
          %v1864 = vld [vmem:[%s16 + $0x38] sm:$0xf]
          %v1865 = vld [vmem:[%s16 + $0x3c] sm:$0xf]
          %v1866 = vld [vmem:[%s17] sm:$0x1]
          %v1868 = vlaneseq
          %v1869 = vshrl.u32 %v1868, 7
          %v1870 = vsub.s32 0, %v1869
          %v1871 = vrot.slane %v1866, %v1870
          %v1889 = vunpack.c.l.b16 %v1850
          %v1890 = vunpack.c.l.b16 %v1851
          %v1891 = vunpack.c.l.b16 %v1852
          %v1892 = vunpack.c.l.b16 %v1853
          %v1893 = vunpack.c.l.b16 %v1854
          %v1894 = vunpack.c.l.b16 %v1855
          %v1895 = vunpack.c.l.b16 %v1856
          %v1896 = vunpack.c.l.b16 %v1857
          %v1897 = vunpack.c.l.b16 %v1858
          %v1898 = vunpack.c.l.b16 %v1859
          %v1899 = vunpack.c.l.b16 %v1860
          %v1900 = vunpack.c.l.b16 %v1861
          %v1901 = vunpack.c.l.b16 %v1862
          %v1902 = vunpack.c.l.b16 %v1863
          %v1903 = vunpack.c.l.b16 %v1864
          %v1904 = vunpack.c.l.b16 %v1865
          %v1905 = vpack.c.b16 %v1890, %v1889
          %v1906 = vpack.c.b16 %v1892, %v1891
          %v1907 = vpack.c.b16 %v1894, %v1893
          %v1908 = vpack.c.b16 %v1896, %v1895
          %v1909 = vpack.c.b16 %v1898, %v1897
          %v1910 = vpack.c.b16 %v1900, %v1899
          %v1911 = vpack.c.b16 %v1902, %v1901
          %v1912 = vpack.c.b16 %v1904, %v1903
          %1921 = vmatprep.subr.bf16.mxu0 0
          %1922 = vmatpush1.bf16.msra.mxu0 %v1905
          %1923 = vmatprep.subr.bf16.mxu0 0
          %1924 = vmatpush1.bf16.msra.mxu0 %v1906
          %1925 = vmatprep.subr.bf16.mxu0 0
          %1926 = vmatpush1.bf16.msra.mxu0 %v1907
          %1927 = vmatprep.subr.bf16.mxu0 0
          %1928 = vmatpush1.bf16.msra.mxu0 %v1908
          %1929 = vmatprep.subr.bf16.mxu0 0
          %1930 = vmatpush1.bf16.msra.mxu0 %v1909
          %1931 = vmatprep.subr.bf16.mxu0 0
          %1932 = vmatpush1.bf16.msra.mxu0 %v1910
          %1933 = vmatprep.subr.bf16.mxu0 0
          %1934 = vmatpush1.bf16.msra.mxu0 %v1911
          %1935 = vmatprep.subr.bf16.mxu0 0
          %1936 = vmatpush1.bf16.msra.mxu0 %v1912
          %1937 = vmatprep.subr.bf16.mxu0 0
          %1938 = vmatpush1.bf16.msra.mxu0 0
          %1939 = vmatprep.subr.bf16.mxu0 0
          %1940 = vmatpush1.bf16.msra.mxu0 0
          %1941 = vmatprep.subr.bf16.mxu0 0
          %1942 = vmatpush1.bf16.msra.mxu0 0
          %1943 = vmatprep.subr.bf16.mxu0 0
          %1944 = vmatpush1.bf16.msra.mxu0 0
          %1945 = vmatprep.subr.bf16.mxu0 0
          %1946 = vmatpush1.bf16.msra.mxu0 0
          %1947 = vmatprep.subr.bf16.mxu0 0
          %1948 = vmatpush1.bf16.msra.mxu0 0
          %1949 = vmatprep.subr.bf16.mxu0 0
          %1950 = vmatpush1.bf16.msra.mxu0 0
          %1951 = vmatprep.subr.bf16.mxu0 0
          %1952 = vmatpush1.bf16.msra.mxu0 0
          %1953 = vmatprep.mubr.bf16.mxu0 0
          %1954 = vmatmul.mubr.bf16.gmra.mrb[0].mxu0 %v1849
          %v1955 = vpop.f32.mrb[0].mxu0
          %v1956 = vadd.f32 %v1871, %v1955
          %v1957 = vpop.f32.mrb[0].mxu0
          %v1958 = vpop.f32.mrb[0].mxu0
          %v1959 = vpop.f32.mrb[0].mxu0
          %1960 = vdwg.mxu0
          %v1961 = vadd.f32 %v1742, %v1956
          %1962 = vst.msk [vmem:[%s737] sm:$0xff] %vm1697, %v1961
        $region140: #{tpu_custom_call.1} parent=91 // pred_fallthru
          _
        %s1963 = sand.u32 %s458, 1
        %s1964 = scalar_lea.sflag [#allocation8], %s1963
        %s1965 = sand.u32 %s458, 1
        %s1966 = smul.addr %s1965, 8
        %s1967 = scalar_lea.vmem [#allocation21], %s1966
        // Predicated region
        $region141: #{tpu_custom_call.1} parent=91 // pred_check
          %p1968 = pneg %p468
        $region142: #{tpu_custom_call.1} parent=91 // pred_check_branch
          %1970 = sbr.rel (%p1968) target = $region144
        $region143: #{tpu_custom_call.1} parent=91 // pred_region
          %s1972 = ssub.s32 128, 128
          %1973 = vsyncadd %s1964, %s1972
          %s1974 = smul.addr %s42, 2
          %s1975 = sadd.s32 %s43, %s1974
          %s1976 = smul.addr %s1975, 128
          %s1977 = scalar_lea.hbm %s18, %s1976
          %s1979 = sshll.u32 %s1967, 4
          %s1980 = int_to_ptr.vmem [resolvable:$true] %s1979
          %1982 = dma.vmem_to_hbm [thread:$0]  %s1980, 128, %s1977, %s1964
        $region144: #{tpu_custom_call.1} parent=91 // pred_fallthru
          _
      $region92: #{tpu_custom_call.1} parent=5 // pred_fallthru
        _
      %p1983 = scmp.le.s32.totalorder 2, %s32
      // Predicated region
      $region145: #{tpu_custom_call.1} parent=5 // pred_check
        %p1984 = pneg %p1983
      $region146: #{tpu_custom_call.1} parent=5 // pred_check_branch
        %1986 = sbr.rel (%p1984) target = $region148
      $region147: #{tpu_custom_call.1} parent=5 // pred_region
        %s1987 = ssub.s32 %s32, 2
        // Predicated region
        $region149: #{tpu_custom_call.1} parent=147 // pred_check
          %p1988 = pneg %p474
        $region150: #{tpu_custom_call.1} parent=147 // pred_check_branch
          %1990 = sbr.rel (%p1988) target = $region152
        $region151: #{tpu_custom_call.1} parent=147 // pred_region
          %s1991 = sand.u32 %s459, 1
          %s1992 = scalar_lea.sflag [#allocation8], %s1991
          %s1993 = sand.u32 %s459, 1
          %s1994 = smul.addr %s1993, 8
          %s1995 = scalar_lea.vmem [#allocation21], %s1994
          %1996 = dma.done %s1992, 128
        $region152: #{tpu_custom_call.1} parent=147 // pred_fallthru
          _
      $region148: #{tpu_custom_call.1} parent=5 // pred_fallthru
        _
    $region6: #{tpu_custom_call.1} parent=1 // loop_footer
      %s36 = sadd.s32 1, %s32
    $region7: #{tpu_custom_call.1} parent=1 // loop_footer_branch
      %31 = sbr.rel target = $region3
    $region8: #{tpu_custom_call.1} parent=1 // loop_exit
      _
    %1997 = vsyncpa [#allocation7], 1
    %s1998 = scalar_lea.sflag [#allocation7], 1
    %1999 = vsyncpa %s1998, 1
    %2000 = vsyncpa [#allocation10], 1
    %2001 = vsyncpa [#allocation13], 1
    %2002 = vsyncpa [#allocation16], 1
    %2003 = vsyncpa [#allocation19], 1
    %2004 = vsyncpa [#allocation8], 1
    %s2005 = scalar_lea.sflag [#allocation8], 1
    %2006 = vsyncpa %s2005, 1

</llo_original>
